<compile_context>
chip_gen: v7x
topology: tpu7x:2x2x1
jax: 0.10.0
libtpu: 0.0.40
codegen_flags: <defaults>
</compile_context>

<pallas_src>
import functools

import jax
import jax.numpy as jnp
from jax import lax
from jax.experimental import pallas as pl
from jax.experimental.pallas import tpu as pltpu

# ---------------- synthetic config consistent with the module forward -------
IMG = 16
IN_CH = 3
PATCH = 4
GRID_HW = IMG // PATCH
NUM_PATCHES = GRID_HW * GRID_HW              # L = 16 patches
NUM_FEATURES = 32                            # encoder.num_features == token_size (C)
NHEAD = 2
HEAD_DIM = NUM_FEATURES // NHEAD             # Dh = 16
FFN = 64                                     # transformer dim_feedforward
TOKEN_DIM_DICT = {"expcode": 10, "globalpose": 6}   # values only define torch `outsize`
TOKEN_NAMES = tuple(TOKEN_DIM_DICT.keys())
NUM_TOKENS = len(TOKEN_NAMES)                # T = 2
SEQ = NUM_TOKENS + NUM_PATCHES               # S = 18
LN_EPS = 1e-5
PATCH_K = IN_CH * PATCH * PATCH              # K = 48
LANE = 128

# ---------------- packed weight-slab layout (row offsets multiples of 8) ----
_W_EMBED_R = 0        # [K=48, C=32]   patch-embedding projection
_W_QKV_R = 48         # [C=32, 3C=96]  fused q|k|v projection
_W_O_R = 80           # [C=32, C=32]   attention output projection
_W_FF1_R = 112        # [C=32, FFN=64]
_W_FF2_R = 144        # [FFN=64, C=32]
_W_HEAD_R = 208       # [T*C=64, T*C=64] block-diagonal per-token heads
_W_ROWS = 272         # multiple of 8

# vector slab: one padded 128-lane row per bias/gain vector
(_V_BEMB, _V_BQKV, _V_BO, _V_LN1G, _V_LN1B,
 _V_FB1, _V_FB2, _V_LN2G, _V_LN2B, _V_HB) = range(10)
_V_TQ = 10            # rows 10..10+T-1: learned token queries
_V_ROWS = 16          # multiple of 8


def _layernorm(x, g, b):
    mu = jnp.mean(x, axis=-1, keepdims=True)
    var = jnp.mean((x - mu) ** 2, axis=-1, keepdims=True)
    return (x - mu) * lax.rsqrt(var + LN_EPS) * g + b


# ---------- fused kernel: patch embed + encoder layer + token heads ----------
def _swin_token_kernel(xp_ref, w_ref, vec_ref, out_ref, *, bb):
    C, T, H, D = NUM_FEATURES, NUM_TOKENS, NHEAD, HEAD_DIM

    # ---- load weights / vectors once (static ref slices -> windowed loads) --
    w_embed = w_ref[_W_EMBED_R:_W_EMBED_R + PATCH_K, 0:C]
    w_qkv = w_ref[_W_QKV_R:_W_QKV_R + C, 0:3 * C]
    w_o = w_ref[_W_O_R:_W_O_R + C, 0:C]
    w_ff1 = w_ref[_W_FF1_R:_W_FF1_R + C, 0:FFN]
    w_ff2 = w_ref[_W_FF2_R:_W_FF2_R + FFN, 0:C]
    w_head = w_ref[_W_HEAD_R:_W_HEAD_R + T * C, 0:T * C]

    b_emb = vec_ref[_V_BEMB:_V_BEMB + 1, 0:C]
    b_qkv = vec_ref[_V_BQKV:_V_BQKV + 1, 0:3 * C]
    b_o = vec_ref[_V_BO:_V_BO + 1, 0:C]
    ln1_g = vec_ref[_V_LN1G:_V_LN1G + 1, 0:C]
    ln1_b = vec_ref[_V_LN1B:_V_LN1B + 1, 0:C]
    fb1 = vec_ref[_V_FB1:_V_FB1 + 1, 0:FFN]
    fb2 = vec_ref[_V_FB2:_V_FB2 + 1, 0:C]
    ln2_g = vec_ref[_V_LN2G:_V_LN2G + 1, 0:C]
    ln2_b = vec_ref[_V_LN2B:_V_LN2B + 1, 0:C]
    h_b = vec_ref[_V_HB:_V_HB + 1, 0:T * C]
    tq = vec_ref[_V_TQ:_V_TQ + T, 0:C]

    scale = 1.0 / (D ** 0.5)

    for b in range(bb):                                   # static; bb in {1, 2}
        # --- patch embedding (non-overlapping conv == im2col matmul) --------
        patches = (jnp.dot(xp_ref[b], w_embed,
                           preferred_element_type=jnp.float32) + b_emb)   # [L, C]

        # --- prepend learned token queries -----------------------------------
        x = jnp.concatenate([tq, patches], axis=0)                        # [S, C]

        # --- multi-head self attention: one fused QKV matmul -----------------
        qkv = (jnp.dot(x, w_qkv, preferred_element_type=jnp.float32)
               + b_qkv)                                                    # [S, 3C]

        o_heads = []
        for h in range(H):                                 # static tiny head loop
            q = qkv[:, h * D:(h + 1) * D]                                  # [S, Dh]
            k = qkv[:, C + h * D:C + (h + 1) * D]
            v = qkv[:, 2 * C + h * D:2 * C + (h + 1) * D]
            s = jnp.einsum('qd,kd->qk', q, k,
                           preferred_element_type=jnp.float32) * scale     # [S, S]
            s = s - jnp.max(s, axis=-1, keepdims=True)
            p = jnp.exp(s)
            p = p * pl.reciprocal(jnp.sum(p, axis=-1, keepdims=True), approx=True)
            o_heads.append(jnp.dot(p, v, preferred_element_type=jnp.float32))
        o = jnp.concatenate(o_heads, axis=-1)                              # [S, C]

        # single output-projection matmul (heads already lane-contiguous)
        attn = jnp.dot(o, w_o, preferred_element_type=jnp.float32) + b_o
        x = _layernorm(x + attn, ln1_g, ln1_b)

        # --- feed forward (Linear -> ReLU -> Linear), post-LN ----------------
        ff = jnp.dot(x, w_ff1, preferred_element_type=jnp.float32) + fb1
        ff = jnp.maximum(ff, 0.0)
        ff = jnp.dot(ff, w_ff2, preferred_element_type=jnp.float32) + fb2
        y = _layernorm(x + ff, ln2_g, ln2_b)

        # --- per-token linear heads via one block-diagonal matmul ------------
        feat_row = jnp.concatenate([y[t:t + 1, :] for t in range(T)],
                                   axis=1)                                 # [1, T*C]
        tok_row = (jnp.dot(feat_row, w_head,
                           preferred_element_type=jnp.float32) + h_b)      # [1, T*C]

        # lane-dense 128-wide output row: [tokens | features], direct stores
        out_ref[b, 0:1, 0:T * C] = tok_row.astype(out_ref.dtype)
        out_ref[b, 0:1, T * C:2 * T * C] = feat_row.astype(out_ref.dtype)


# ---------------- wrapper-side param packing into 2 slabs -------------------
def _pack_params(p):
    C, T = NUM_FEATURES, NUM_TOKENS

    def put(slab, row, a):
        r, c = a.shape
        return slab.at[row:row + r, 0:c].set(a)

    wqkv = jnp.concatenate([p["wq"], p["wk"], p["wv"]], axis=1)            # [C, 3C]
    hw_bd = jax.scipy.linalg.block_diag(*[p["head_w"][t] for t in range(T)])

    w_slab = jnp.zeros((_W_ROWS, LANE), jnp.float32)
    w_slab = put(w_slab, _W_EMBED_R, p["w_embed"])
    w_slab = put(w_slab, _W_QKV_R, wqkv)
    w_slab = put(w_slab, _W_O_R, p["wo"])
    w_slab = put(w_slab, _W_FF1_R, p["w1"])
    w_slab = put(w_slab, _W_FF2_R, p["w2"])
    w_slab = put(w_slab, _W_HEAD_R, hw_bd)

    vec_slab = jnp.zeros((_V_ROWS, LANE), jnp.float32)
    vec_slab = put(vec_slab, _V_BEMB, p["b_embed"])
    vec_slab = put(vec_slab, _V_BQKV,
                   jnp.concatenate([p["bq"], p["bk"], p["bv"]], axis=1))
    vec_slab = put(vec_slab, _V_BO, p["bo"])
    vec_slab = put(vec_slab, _V_LN1G, p["ln1_g"])
    vec_slab = put(vec_slab, _V_LN1B, p["ln1_b"])
    vec_slab = put(vec_slab, _V_FB1, p["fb1"])
    vec_slab = put(vec_slab, _V_FB2, p["fb2"])
    vec_slab = put(vec_slab, _V_LN2G, p["ln2_g"])
    vec_slab = put(vec_slab, _V_LN2B, p["ln2_b"])
    vec_slab = put(vec_slab, _V_HB, p["head_b"].reshape(1, T * C))
    vec_slab = put(vec_slab, _V_TQ, p["token_query"])
    return w_slab, vec_slab


def _two_tensorcores_per_chip():
    # v7x has 2 TensorCores/chip; keep one batch element per core there.
    try:
        kind = jax.devices()[0].device_kind.lower()
    except Exception:
        return False
    return ("v7" in kind) or ("7x" in kind) or ("tpu7" in kind)


def transformer_tokens(xp, p):
    """xp: im2col patches [B, L, K]. Returns (tokens, features), each [B, T*C]."""
    B = xp.shape[0]
    T, C = NUM_TOKENS, NUM_FEATURES
    w_slab, vec_slab = _pack_params(p)

    # batch fold: grid=(1,) on single-TC chips (v5e/v6e), grid=(B,) on v7x
    steps = min(B, 2) if _two_tensorcores_per_chip() else 1
    if B % steps != 0:
        steps = B
    bb = B // steps

    kernel = functools.partial(_swin_token_kernel, bb=bb)
    out = pl.pallas_call(
        kernel,
        grid=(steps,),
        in_specs=[
            pl.BlockSpec((bb, NUM_PATCHES, PATCH_K), lambda i: (i, 0, 0)),   # xp
            pl.BlockSpec((_W_ROWS, LANE), lambda i: (0, 0)),                 # weight slab
            pl.BlockSpec((_V_ROWS, LANE), lambda i: (0, 0)),                 # vector slab
        ],
        out_specs=pl.BlockSpec((bb, 1, 2 * T * C), lambda i: (i, 0, 0)),
        out_shape=jax.ShapeDtypeStruct((B, 1, 2 * T * C), jnp.float32),
        compiler_params=pltpu.CompilerParams(
            dimension_semantics=("parallel",)),
    )(xp, w_slab, vec_slab)

    out = out.reshape(B, 2 * T * C)
    tokens = out[:, :T * C]          # torch.cat(tokens, -1)
    features = out[:, T * C:]        # torch.cat(features, -1)
    return tokens, features


# ------------------------------ parameters ----------------------------------
def init_params(key):
    ks = jax.random.split(key, 10)
    C, K, T = NUM_FEATURES, PATCH_K, NUM_TOKENS
    sc = 1.0 / (C ** 0.5)
    # NOTE: kernel computes x @ W; real PyTorch nn.Linear / nn.MultiheadAttention
    # weights would need transposing (and in_proj_weight splitting) when loaded.
    return {
        "w_embed": jax.random.normal(ks[0], (K, C), jnp.float32) / (K ** 0.5),
        "b_embed": jnp.zeros((1, C), jnp.float32),
        # one nn.Parameter(torch.randn(1, C)) per token name -> stacked [T, C]
        "token_query": jax.random.normal(ks[1], (T, C), jnp.float32),
        "wq": jax.random.normal(ks[2], (C, C), jnp.float32) * sc,
        "bq": jnp.zeros((1, C), jnp.float32),
        "wk": jax.random.normal(ks[3], (C, C), jnp.float32) * sc,
        "bk": jnp.zeros((1, C), jnp.float32),
        "wv": jax.random.normal(ks[4], (C, C), jnp.float32) * sc,
        "bv": jnp.zeros((1, C), jnp.float32),
        "wo": jax.random.normal(ks[5], (C, C), jnp.float32) * sc,
        "bo": jnp.zeros((1, C), jnp.float32),
        "ln1_g": jnp.ones((1, C), jnp.float32),
        "ln1_b": jnp.zeros((1, C), jnp.float32),
        "w1": jax.random.normal(ks[6], (C, FFN), jnp.float32) * sc,
        "fb1": jnp.zeros((1, FFN), jnp.float32),
        "w2": jax.random.normal(ks[7], (FFN, C), jnp.float32) / (FFN ** 0.5),
        "fb2": jnp.zeros((1, C), jnp.float32),
        "ln2_g": jnp.ones((1, C), jnp.float32),
        "ln2_b": jnp.zeros((1, C), jnp.float32),
        # per-token Linear(C, C) heads stacked
        "head_w": jax.random.normal(ks[8], (T, C, C), jnp.float32) * sc,
        "head_b": jnp.zeros((T, C), jnp.float32),
    }


# ------------------------------- forward ------------------------------------
def swin_token_forward(params, x, output_features=False):
    B = x.shape[0]
    # im2col: NCHW -> [B, L, Cin*ps*ps] (stride == kernel => disjoint patches)
    xp = x.reshape(B, IN_CH, GRID_HW, PATCH, GRID_HW, PATCH)
    xp = xp.transpose(0, 2, 4, 1, 3, 5).reshape(B, NUM_PATCHES, PATCH_K)
    # TODO(synk): only the Swin patch-embedding projection is implemented as the
    # backbone stand-in; pretrained windowed-attention stages / patch merging
    # of the Swin encoder are not reproduced.
    # TODO(synk): TransformerEncoderNoBottleneck positional encoding omitted
    # (exact inferno transformer_cfg unavailable); one post-LN encoder layer used.
    tokens, features = transformer_tokens(xp, params)
    if not output_features:
        return tokens
    return tokens, features


if __name__ == "__main__":
    key = jax.random.PRNGKey(0)
    pkey, xkey = jax.random.split(key)
    params = init_params(pkey)
    x = jax.random.normal(xkey, (2, IN_CH, IMG, IMG), jnp.float32)   # NCHW, like PyTorch

    fwd = jax.jit(lambda a: swin_token_forward(params, a, output_features=True))
    tokens, features = fwd(x)
    jax.block_until_ready((tokens, features))

    assert tokens.shape == (2, NUM_TOKENS * NUM_FEATURES)
    assert features.shape == (2, NUM_TOKENS * NUM_FEATURES)
    assert bool(jnp.all(jnp.isfinite(tokens))) and bool(jnp.all(jnp.isfinite(features)))
    print("KERNEL_OK")
</pallas_src>

<mosaic_0001>
module attributes {stable_mosaic.version = 11 : i64} {
  func.func @_swin_token_kernel(%arg0: i32, %arg1: memref<2x16x48xf32, #tpu.memory_space<vmem>>, %arg2: memref<272x128xf32, #tpu.memory_space<vmem>>, %arg3: memref<16x128xf32, #tpu.memory_space<vmem>>, %arg4: memref<2x1x128xf32, #tpu.memory_space<vmem>>) attributes {dimension_semantics = [#tpu.dimension_semantics<parallel>], iteration_bounds = array<i64: 1>, scalar_prefetch = 0 : i64, scratch_operands = 0 : i64, tpu.core_type = #tpu.core_type<tc>, window_params = [{transform_indices = @transform_0, window_bounds = array<i64: 2, 16, 48>}, {pipeline_mode = #tpu.pipeline_mode<synchronous>, transform_indices = @transform_1, window_bounds = array<i64: 272, 128>}, {pipeline_mode = #tpu.pipeline_mode<synchronous>, transform_indices = @transform_2, window_bounds = array<i64: 16, 128>}, {transform_indices = @transform_3, window_bounds = array<i64: 2, 1, 128>}]} {
    %c0 = arith.constant 0 : index
    %c0_0 = arith.constant 0 : index
    %0 = vector.load %arg2[%c0, %c0_0] : memref<272x128xf32, #tpu.memory_space<vmem>>, vector<48x32xf32>
    %c48 = arith.constant 48 : index
    %c0_1 = arith.constant 0 : index
    %1 = vector.load %arg2[%c48, %c0_1] : memref<272x128xf32, #tpu.memory_space<vmem>>, vector<32x96xf32>
    %c80 = arith.constant 80 : index
    %c0_2 = arith.constant 0 : index
    %2 = vector.load %arg2[%c80, %c0_2] : memref<272x128xf32, #tpu.memory_space<vmem>>, vector<32x32xf32>
    %c112 = arith.constant 112 : index
    %c0_3 = arith.constant 0 : index
    %3 = vector.load %arg2[%c112, %c0_3] : memref<272x128xf32, #tpu.memory_space<vmem>>, vector<32x64xf32>
    %c144 = arith.constant 144 : index
    %c0_4 = arith.constant 0 : index
    %4 = vector.load %arg2[%c144, %c0_4] : memref<272x128xf32, #tpu.memory_space<vmem>>, vector<64x32xf32>
    %c208 = arith.constant 208 : index
    %c0_5 = arith.constant 0 : index
    %5 = vector.load %arg2[%c208, %c0_5] : memref<272x128xf32, #tpu.memory_space<vmem>>, vector<64x64xf32>
    %c0_6 = arith.constant 0 : index
    %c0_7 = arith.constant 0 : index
    %6 = vector.load %arg3[%c0_6, %c0_7] : memref<16x128xf32, #tpu.memory_space<vmem>>, vector<1x32xf32>
    %c1 = arith.constant 1 : index
    %c0_8 = arith.constant 0 : index
    %7 = vector.load %arg3[%c1, %c0_8] : memref<16x128xf32, #tpu.memory_space<vmem>>, vector<1x96xf32>
    %c2 = arith.constant 2 : index
    %c0_9 = arith.constant 0 : index
    %8 = vector.load %arg3[%c2, %c0_9] : memref<16x128xf32, #tpu.memory_space<vmem>>, vector<1x32xf32>
    %c3 = arith.constant 3 : index
    %c0_10 = arith.constant 0 : index
    %9 = vector.load %arg3[%c3, %c0_10] : memref<16x128xf32, #tpu.memory_space<vmem>>, vector<1x32xf32>
    %c4 = arith.constant 4 : index
    %c0_11 = arith.constant 0 : index
    %10 = vector.load %arg3[%c4, %c0_11] : memref<16x128xf32, #tpu.memory_space<vmem>>, vector<1x32xf32>
    %c5 = arith.constant 5 : index
    %c0_12 = arith.constant 0 : index
    %11 = vector.load %arg3[%c5, %c0_12] : memref<16x128xf32, #tpu.memory_space<vmem>>, vector<1x64xf32>
    %c6 = arith.constant 6 : index
    %c0_13 = arith.constant 0 : index
    %12 = vector.load %arg3[%c6, %c0_13] : memref<16x128xf32, #tpu.memory_space<vmem>>, vector<1x32xf32>
    %c7 = arith.constant 7 : index
    %c0_14 = arith.constant 0 : index
    %13 = vector.load %arg3[%c7, %c0_14] : memref<16x128xf32, #tpu.memory_space<vmem>>, vector<1x32xf32>
    %c8 = arith.constant 8 : index
    %c0_15 = arith.constant 0 : index
    %14 = vector.load %arg3[%c8, %c0_15] : memref<16x128xf32, #tpu.memory_space<vmem>>, vector<1x32xf32>
    %c9 = arith.constant 9 : index
    %c0_16 = arith.constant 0 : index
    %15 = vector.load %arg3[%c9, %c0_16] : memref<16x128xf32, #tpu.memory_space<vmem>>, vector<1x64xf32>
    %c10 = arith.constant 10 : index
    %c0_17 = arith.constant 0 : index
    %16 = vector.load %arg3[%c10, %c0_17] : memref<16x128xf32, #tpu.memory_space<vmem>>, vector<2x32xf32>
    %c0_18 = arith.constant 0 : index
    %c0_19 = arith.constant 0 : index
    %c0_20 = arith.constant 0 : index
    %17 = vector.load %arg1[%c0_18, %c0_19, %c0_20] : memref<2x16x48xf32, #tpu.memory_space<vmem>>, vector<1x16x48xf32>
    %18 = vector.shape_cast %17 : vector<1x16x48xf32> to vector<16x48xf32>
    %cst = arith.constant dense<0.000000e+00> : vector<16x32xf32>
    %19 = tpu.matmul %18, %0, %cst {dimension_numbers = #tpu.dot_dimension_numbers<[1], [0], [0], [1], [0, 0, 1, 1], [], []>} : vector<16x48xf32>, vector<48x32xf32>, vector<16x32xf32> -> vector<16x32xf32>
    %20 = vector.broadcast %6 : vector<1x32xf32> to vector<16x32xf32>
    %21 = arith.addf %19, %20 : vector<16x32xf32>
    %22 = tpu.concatenate %16, %21 in 0 : vector<2x32xf32>, vector<16x32xf32> -> vector<18x32xf32>
    %cst_21 = arith.constant dense<0.000000e+00> : vector<18x96xf32>
    %23 = tpu.matmul %22, %1, %cst_21 {dimension_numbers = #tpu.dot_dimension_numbers<[1], [0], [0], [1], [0, 0, 1, 1], [], []>} : vector<18x32xf32>, vector<32x96xf32>, vector<18x96xf32> -> vector<18x96xf32>
    %24 = vector.broadcast %7 : vector<1x96xf32> to vector<18x96xf32>
    %25 = arith.addf %23, %24 : vector<18x96xf32>
    %26 = vector.extract_strided_slice %25 {offsets = [0, 0], sizes = [18, 16], strides = [1, 1]} : vector<18x96xf32> to vector<18x16xf32>
    %27 = vector.extract_strided_slice %25 {offsets = [0, 32], sizes = [18, 16], strides = [1, 1]} : vector<18x96xf32> to vector<18x16xf32>
    %28 = vector.extract_strided_slice %25 {offsets = [0, 64], sizes = [18, 16], strides = [1, 1]} : vector<18x96xf32> to vector<18x16xf32>
    "tpu.trace_start"() <{level = 10 : i32, message = "qd,kd->qk"}> : () -> ()
    %cst_22 = arith.constant dense<0.000000e+00> : vector<18x18xf32>
    %29 = tpu.matmul %26, %27, %cst_22 {dimension_numbers = #tpu.dot_dimension_numbers<[1], [1], [0], [0], [0, 0, 1, 0], [], []>} : vector<18x16xf32>, vector<18x16xf32>, vector<18x18xf32> -> vector<18x18xf32>
    "tpu.trace_stop"() : () -> ()
    %cst_23 = arith.constant 2.500000e-01 : f32
    %30 = vector.broadcast %cst_23 : f32 to vector<18x18xf32>
    %31 = arith.mulf %29, %30 : vector<18x18xf32>
    %cst_24 = arith.constant dense<0xFF800000> : vector<18xf32>
    %32 = vector.multi_reduction <maximumf>, %31, %cst_24 [1] : vector<18x18xf32> to vector<18xf32>
    %33 = vector.shape_cast %32 : vector<18xf32> to vector<18x1xf32>
    %34 = vector.broadcast %33 : vector<18x1xf32> to vector<18x18xf32>
    %35 = arith.subf %31, %34 : vector<18x18xf32>
    %36 = math.exp %35 : vector<18x18xf32>
    %cst_25 = arith.constant dense<0.000000e+00> : vector<18xf32>
    %37 = vector.multi_reduction <add>, %36, %cst_25 [1] : vector<18x18xf32> to vector<18xf32>
    %38 = vector.shape_cast %37 : vector<18xf32> to vector<18x1xf32>
    %39 = tpu.reciprocal %38 {approx = true} : vector<18x1xf32> -> vector<18x1xf32>
    %40 = vector.broadcast %39 : vector<18x1xf32> to vector<18x18xf32>
    %41 = arith.mulf %36, %40 : vector<18x18xf32>
    %cst_26 = arith.constant dense<0.000000e+00> : vector<18x16xf32>
    %42 = tpu.matmul %41, %28, %cst_26 {dimension_numbers = #tpu.dot_dimension_numbers<[1], [0], [0], [1], [0, 0, 1, 1], [], []>} : vector<18x18xf32>, vector<18x16xf32>, vector<18x16xf32> -> vector<18x16xf32>
    %43 = vector.extract_strided_slice %25 {offsets = [0, 16], sizes = [18, 16], strides = [1, 1]} : vector<18x96xf32> to vector<18x16xf32>
    %44 = vector.extract_strided_slice %25 {offsets = [0, 48], sizes = [18, 16], strides = [1, 1]} : vector<18x96xf32> to vector<18x16xf32>
    %45 = vector.extract_strided_slice %25 {offsets = [0, 80], sizes = [18, 16], strides = [1, 1]} : vector<18x96xf32> to vector<18x16xf32>
    "tpu.trace_start"() <{level = 10 : i32, message = "qd,kd->qk"}> : () -> ()
    %cst_27 = arith.constant dense<0.000000e+00> : vector<18x18xf32>
    %46 = tpu.matmul %43, %44, %cst_27 {dimension_numbers = #tpu.dot_dimension_numbers<[1], [1], [0], [0], [0, 0, 1, 0], [], []>} : vector<18x16xf32>, vector<18x16xf32>, vector<18x18xf32> -> vector<18x18xf32>
    "tpu.trace_stop"() : () -> ()
    %cst_28 = arith.constant 2.500000e-01 : f32
    %47 = vector.broadcast %cst_28 : f32 to vector<18x18xf32>
    %48 = arith.mulf %46, %47 : vector<18x18xf32>
    %cst_29 = arith.constant dense<0xFF800000> : vector<18xf32>
    %49 = vector.multi_reduction <maximumf>, %48, %cst_29 [1] : vector<18x18xf32> to vector<18xf32>
    %50 = vector.shape_cast %49 : vector<18xf32> to vector<18x1xf32>
    %51 = vector.broadcast %50 : vector<18x1xf32> to vector<18x18xf32>
    %52 = arith.subf %48, %51 : vector<18x18xf32>
    %53 = math.exp %52 : vector<18x18xf32>
    %cst_30 = arith.constant dense<0.000000e+00> : vector<18xf32>
    %54 = vector.multi_reduction <add>, %53, %cst_30 [1] : vector<18x18xf32> to vector<18xf32>
    %55 = vector.shape_cast %54 : vector<18xf32> to vector<18x1xf32>
    %56 = tpu.reciprocal %55 {approx = true} : vector<18x1xf32> -> vector<18x1xf32>
    %57 = vector.broadcast %56 : vector<18x1xf32> to vector<18x18xf32>
    %58 = arith.mulf %53, %57 : vector<18x18xf32>
    %cst_31 = arith.constant dense<0.000000e+00> : vector<18x16xf32>
    %59 = tpu.matmul %58, %45, %cst_31 {dimension_numbers = #tpu.dot_dimension_numbers<[1], [0], [0], [1], [0, 0, 1, 1], [], []>} : vector<18x18xf32>, vector<18x16xf32>, vector<18x16xf32> -> vector<18x16xf32>
    %60 = tpu.concatenate %42, %59 in 1 : vector<18x16xf32>, vector<18x16xf32> -> vector<18x32xf32>
    %cst_32 = arith.constant dense<0.000000e+00> : vector<18x32xf32>
    %61 = tpu.matmul %60, %2, %cst_32 {dimension_numbers = #tpu.dot_dimension_numbers<[1], [0], [0], [1], [0, 0, 1, 1], [], []>} : vector<18x32xf32>, vector<32x32xf32>, vector<18x32xf32> -> vector<18x32xf32>
    %62 = vector.broadcast %8 : vector<1x32xf32> to vector<18x32xf32>
    %63 = arith.addf %61, %62 : vector<18x32xf32>
    %64 = arith.addf %22, %63 : vector<18x32xf32>
    %cst_33 = arith.constant dense<0.000000e+00> : vector<18xf32>
    %65 = vector.multi_reduction <add>, %64, %cst_33 [1] : vector<18x32xf32> to vector<18xf32>
    %66 = vector.shape_cast %65 : vector<18xf32> to vector<18x1xf32>
    %cst_34 = arith.constant 3.200000e+01 : f32
    %67 = vector.broadcast %cst_34 : f32 to vector<18x1xf32>
    %68 = arith.divf %66, %67 : vector<18x1xf32>
    %69 = vector.broadcast %68 : vector<18x1xf32> to vector<18x32xf32>
    %70 = arith.subf %64, %69 : vector<18x32xf32>
    %71 = arith.mulf %70, %70 : vector<18x32xf32>
    %cst_35 = arith.constant dense<0.000000e+00> : vector<18xf32>
    %72 = vector.multi_reduction <add>, %71, %cst_35 [1] : vector<18x32xf32> to vector<18xf32>
    %73 = vector.shape_cast %72 : vector<18xf32> to vector<18x1xf32>
    %cst_36 = arith.constant 3.200000e+01 : f32
    %74 = vector.broadcast %cst_36 : f32 to vector<18x1xf32>
    %75 = arith.divf %73, %74 : vector<18x1xf32>
    %76 = vector.broadcast %68 : vector<18x1xf32> to vector<18x32xf32>
    %77 = arith.subf %64, %76 : vector<18x32xf32>
    %cst_37 = arith.constant 9.99999974E-6 : f32
    %78 = vector.broadcast %cst_37 : f32 to vector<18x1xf32>
    %79 = arith.addf %75, %78 : vector<18x1xf32>
    %80 = math.rsqrt %79 : vector<18x1xf32>
    %81 = vector.broadcast %80 : vector<18x1xf32> to vector<18x32xf32>
    %82 = arith.mulf %77, %81 : vector<18x32xf32>
    %83 = vector.broadcast %9 : vector<1x32xf32> to vector<18x32xf32>
    %84 = arith.mulf %82, %83 : vector<18x32xf32>
    %85 = vector.broadcast %10 : vector<1x32xf32> to vector<18x32xf32>
    %86 = arith.addf %84, %85 : vector<18x32xf32>
    %cst_38 = arith.constant dense<0.000000e+00> : vector<18x64xf32>
    %87 = tpu.matmul %86, %3, %cst_38 {dimension_numbers = #tpu.dot_dimension_numbers<[1], [0], [0], [1], [0, 0, 1, 1], [], []>} : vector<18x32xf32>, vector<32x64xf32>, vector<18x64xf32> -> vector<18x64xf32>
    %88 = vector.broadcast %11 : vector<1x64xf32> to vector<18x64xf32>
    %89 = arith.addf %87, %88 : vector<18x64xf32>
    %cst_39 = arith.constant 0.000000e+00 : f32
    %90 = vector.broadcast %cst_39 : f32 to vector<18x64xf32>
    %91 = arith.maximumf %89, %90 : vector<18x64xf32>
    %cst_40 = arith.constant dense<0.000000e+00> : vector<18x32xf32>
    %92 = tpu.matmul %91, %4, %cst_40 {dimension_numbers = #tpu.dot_dimension_numbers<[1], [0], [0], [1], [0, 0, 1, 1], [], []>} : vector<18x64xf32>, vector<64x32xf32>, vector<18x32xf32> -> vector<18x32xf32>
    %93 = vector.broadcast %12 : vector<1x32xf32> to vector<18x32xf32>
    %94 = arith.addf %92, %93 : vector<18x32xf32>
    %95 = arith.addf %86, %94 : vector<18x32xf32>
    %cst_41 = arith.constant dense<0.000000e+00> : vector<18xf32>
    %96 = vector.multi_reduction <add>, %95, %cst_41 [1] : vector<18x32xf32> to vector<18xf32>
    %97 = vector.shape_cast %96 : vector<18xf32> to vector<18x1xf32>
    %cst_42 = arith.constant 3.200000e+01 : f32
    %98 = vector.broadcast %cst_42 : f32 to vector<18x1xf32>
    %99 = arith.divf %97, %98 : vector<18x1xf32>
    %100 = vector.broadcast %99 : vector<18x1xf32> to vector<18x32xf32>
    %101 = arith.subf %95, %100 : vector<18x32xf32>
    %102 = arith.mulf %101, %101 : vector<18x32xf32>
    %cst_43 = arith.constant dense<0.000000e+00> : vector<18xf32>
    %103 = vector.multi_reduction <add>, %102, %cst_43 [1] : vector<18x32xf32> to vector<18xf32>
    %104 = vector.shape_cast %103 : vector<18xf32> to vector<18x1xf32>
    %cst_44 = arith.constant 3.200000e+01 : f32
    %105 = vector.broadcast %cst_44 : f32 to vector<18x1xf32>
    %106 = arith.divf %104, %105 : vector<18x1xf32>
    %107 = vector.broadcast %99 : vector<18x1xf32> to vector<18x32xf32>
    %108 = arith.subf %95, %107 : vector<18x32xf32>
    %cst_45 = arith.constant 9.99999974E-6 : f32
    %109 = vector.broadcast %cst_45 : f32 to vector<18x1xf32>
    %110 = arith.addf %106, %109 : vector<18x1xf32>
    %111 = math.rsqrt %110 : vector<18x1xf32>
    %112 = vector.broadcast %111 : vector<18x1xf32> to vector<18x32xf32>
    %113 = arith.mulf %108, %112 : vector<18x32xf32>
    %114 = vector.broadcast %13 : vector<1x32xf32> to vector<18x32xf32>
    %115 = arith.mulf %113, %114 : vector<18x32xf32>
    %116 = vector.broadcast %14 : vector<1x32xf32> to vector<18x32xf32>
    %117 = arith.addf %115, %116 : vector<18x32xf32>
    %118 = vector.extract_strided_slice %117 {offsets = [0, 0], sizes = [1, 32], strides = [1, 1]} : vector<18x32xf32> to vector<1x32xf32>
    %119 = vector.extract_strided_slice %117 {offsets = [1, 0], sizes = [1, 32], strides = [1, 1]} : vector<18x32xf32> to vector<1x32xf32>
    %120 = tpu.concatenate %118, %119 in 1 : vector<1x32xf32>, vector<1x32xf32> -> vector<1x64xf32>
    %cst_46 = arith.constant dense<0.000000e+00> : vector<1x64xf32>
    %121 = tpu.matmul %120, %5, %cst_46 {dimension_numbers = #tpu.dot_dimension_numbers<[1], [0], [0], [1], [0, 0, 1, 1], [], []>} : vector<1x64xf32>, vector<64x64xf32>, vector<1x64xf32> -> vector<1x64xf32>
    %122 = arith.addf %121, %15 : vector<1x64xf32>
    %c0_47 = arith.constant 0 : index
    %c0_48 = arith.constant 0 : index
    %c0_49 = arith.constant 0 : index
    %123 = vector.load %arg4[%c0_47, %c0_48, %c0_49] : memref<2x1x128xf32, #tpu.memory_space<vmem>>, vector<1x1x64xf32>
    %124 = vector.shape_cast %123 : vector<1x1x64xf32> to vector<1x64xf32>
    %125 = vector.shape_cast %122 : vector<1x64xf32> to vector<1x1x64xf32>
    tpu.vector_store %arg4[%c0_47, %c0_48, %c0_49], %125 {strides = array<i32>} : memref<2x1x128xf32, #tpu.memory_space<vmem>>, vector<1x1x64xf32>,
    %c0_50 = arith.constant 0 : index
    %c0_51 = arith.constant 0 : index
    %c64 = arith.constant 64 : index
    %126 = vector.load %arg4[%c0_50, %c0_51, %c64] : memref<2x1x128xf32, #tpu.memory_space<vmem>>, vector<1x1x64xf32>
    %127 = vector.shape_cast %126 : vector<1x1x64xf32> to vector<1x64xf32>
    %128 = vector.shape_cast %120 : vector<1x64xf32> to vector<1x1x64xf32>
    tpu.vector_store %arg4[%c0_50, %c0_51, %c64], %128 {strides = array<i32>} : memref<2x1x128xf32, #tpu.memory_space<vmem>>, vector<1x1x64xf32>,
    %c1_52 = arith.constant 1 : index
    %c0_53 = arith.constant 0 : index
    %c0_54 = arith.constant 0 : index
    %129 = vector.load %arg1[%c1_52, %c0_53, %c0_54] : memref<2x16x48xf32, #tpu.memory_space<vmem>>, vector<1x16x48xf32>
    %130 = vector.shape_cast %129 : vector<1x16x48xf32> to vector<16x48xf32>
    %cst_55 = arith.constant dense<0.000000e+00> : vector<16x32xf32>
    %131 = tpu.matmul %130, %0, %cst_55 {dimension_numbers = #tpu.dot_dimension_numbers<[1], [0], [0], [1], [0, 0, 1, 1], [], []>} : vector<16x48xf32>, vector<48x32xf32>, vector<16x32xf32> -> vector<16x32xf32>
    %132 = vector.broadcast %6 : vector<1x32xf32> to vector<16x32xf32>
    %133 = arith.addf %131, %132 : vector<16x32xf32>
    %134 = tpu.concatenate %16, %133 in 0 : vector<2x32xf32>, vector<16x32xf32> -> vector<18x32xf32>
    %cst_56 = arith.constant dense<0.000000e+00> : vector<18x96xf32>
    %135 = tpu.matmul %134, %1, %cst_56 {dimension_numbers = #tpu.dot_dimension_numbers<[1], [0], [0], [1], [0, 0, 1, 1], [], []>} : vector<18x32xf32>, vector<32x96xf32>, vector<18x96xf32> -> vector<18x96xf32>
    %136 = vector.broadcast %7 : vector<1x96xf32> to vector<18x96xf32>
    %137 = arith.addf %135, %136 : vector<18x96xf32>
    %138 = vector.extract_strided_slice %137 {offsets = [0, 0], sizes = [18, 16], strides = [1, 1]} : vector<18x96xf32> to vector<18x16xf32>
    %139 = vector.extract_strided_slice %137 {offsets = [0, 32], sizes = [18, 16], strides = [1, 1]} : vector<18x96xf32> to vector<18x16xf32>
    %140 = vector.extract_strided_slice %137 {offsets = [0, 64], sizes = [18, 16], strides = [1, 1]} : vector<18x96xf32> to vector<18x16xf32>
    "tpu.trace_start"() <{level = 10 : i32, message = "qd,kd->qk"}> : () -> ()
    %cst_57 = arith.constant dense<0.000000e+00> : vector<18x18xf32>
    %141 = tpu.matmul %138, %139, %cst_57 {dimension_numbers = #tpu.dot_dimension_numbers<[1], [1], [0], [0], [0, 0, 1, 0], [], []>} : vector<18x16xf32>, vector<18x16xf32>, vector<18x18xf32> -> vector<18x18xf32>
    "tpu.trace_stop"() : () -> ()
    %cst_58 = arith.constant 2.500000e-01 : f32
    %142 = vector.broadcast %cst_58 : f32 to vector<18x18xf32>
    %143 = arith.mulf %141, %142 : vector<18x18xf32>
    %cst_59 = arith.constant dense<0xFF800000> : vector<18xf32>
    %144 = vector.multi_reduction <maximumf>, %143, %cst_59 [1] : vector<18x18xf32> to vector<18xf32>
    %145 = vector.shape_cast %144 : vector<18xf32> to vector<18x1xf32>
    %146 = vector.broadcast %145 : vector<18x1xf32> to vector<18x18xf32>
    %147 = arith.subf %143, %146 : vector<18x18xf32>
    %148 = math.exp %147 : vector<18x18xf32>
    %cst_60 = arith.constant dense<0.000000e+00> : vector<18xf32>
    %149 = vector.multi_reduction <add>, %148, %cst_60 [1] : vector<18x18xf32> to vector<18xf32>
    %150 = vector.shape_cast %149 : vector<18xf32> to vector<18x1xf32>
    %151 = tpu.reciprocal %150 {approx = true} : vector<18x1xf32> -> vector<18x1xf32>
    %152 = vector.broadcast %151 : vector<18x1xf32> to vector<18x18xf32>
    %153 = arith.mulf %148, %152 : vector<18x18xf32>
    %cst_61 = arith.constant dense<0.000000e+00> : vector<18x16xf32>
    %154 = tpu.matmul %153, %140, %cst_61 {dimension_numbers = #tpu.dot_dimension_numbers<[1], [0], [0], [1], [0, 0, 1, 1], [], []>} : vector<18x18xf32>, vector<18x16xf32>, vector<18x16xf32> -> vector<18x16xf32>
    %155 = vector.extract_strided_slice %137 {offsets = [0, 16], sizes = [18, 16], strides = [1, 1]} : vector<18x96xf32> to vector<18x16xf32>
    %156 = vector.extract_strided_slice %137 {offsets = [0, 48], sizes = [18, 16], strides = [1, 1]} : vector<18x96xf32> to vector<18x16xf32>
    %157 = vector.extract_strided_slice %137 {offsets = [0, 80], sizes = [18, 16], strides = [1, 1]} : vector<18x96xf32> to vector<18x16xf32>
    "tpu.trace_start"() <{level = 10 : i32, message = "qd,kd->qk"}> : () -> ()
    %cst_62 = arith.constant dense<0.000000e+00> : vector<18x18xf32>
    %158 = tpu.matmul %155, %156, %cst_62 {dimension_numbers = #tpu.dot_dimension_numbers<[1], [1], [0], [0], [0, 0, 1, 0], [], []>} : vector<18x16xf32>, vector<18x16xf32>, vector<18x18xf32> -> vector<18x18xf32>
    "tpu.trace_stop"() : () -> ()
    %cst_63 = arith.constant 2.500000e-01 : f32
    %159 = vector.broadcast %cst_63 : f32 to vector<18x18xf32>
    %160 = arith.mulf %158, %159 : vector<18x18xf32>
    %cst_64 = arith.constant dense<0xFF800000> : vector<18xf32>
    %161 = vector.multi_reduction <maximumf>, %160, %cst_64 [1] : vector<18x18xf32> to vector<18xf32>
    %162 = vector.shape_cast %161 : vector<18xf32> to vector<18x1xf32>
    %163 = vector.broadcast %162 : vector<18x1xf32> to vector<18x18xf32>
    %164 = arith.subf %160, %163 : vector<18x18xf32>
    %165 = math.exp %164 : vector<18x18xf32>
    %cst_65 = arith.constant dense<0.000000e+00> : vector<18xf32>
    %166 = vector.multi_reduction <add>, %165, %cst_65 [1] : vector<18x18xf32> to vector<18xf32>
    %167 = vector.shape_cast %166 : vector<18xf32> to vector<18x1xf32>
    %168 = tpu.reciprocal %167 {approx = true} : vector<18x1xf32> -> vector<18x1xf32>
    %169 = vector.broadcast %168 : vector<18x1xf32> to vector<18x18xf32>
    %170 = arith.mulf %165, %169 : vector<18x18xf32>
    %cst_66 = arith.constant dense<0.000000e+00> : vector<18x16xf32>
    %171 = tpu.matmul %170, %157, %cst_66 {dimension_numbers = #tpu.dot_dimension_numbers<[1], [0], [0], [1], [0, 0, 1, 1], [], []>} : vector<18x18xf32>, vector<18x16xf32>, vector<18x16xf32> -> vector<18x16xf32>
    %172 = tpu.concatenate %154, %171 in 1 : vector<18x16xf32>, vector<18x16xf32> -> vector<18x32xf32>
    %cst_67 = arith.constant dense<0.000000e+00> : vector<18x32xf32>
    %173 = tpu.matmul %172, %2, %cst_67 {dimension_numbers = #tpu.dot_dimension_numbers<[1], [0], [0], [1], [0, 0, 1, 1], [], []>} : vector<18x32xf32>, vector<32x32xf32>, vector<18x32xf32> -> vector<18x32xf32>
    %174 = vector.broadcast %8 : vector<1x32xf32> to vector<18x32xf32>
    %175 = arith.addf %173, %174 : vector<18x32xf32>
    %176 = arith.addf %134, %175 : vector<18x32xf32>
    %cst_68 = arith.constant dense<0.000000e+00> : vector<18xf32>
    %177 = vector.multi_reduction <add>, %176, %cst_68 [1] : vector<18x32xf32> to vector<18xf32>
    %178 = vector.shape_cast %177 : vector<18xf32> to vector<18x1xf32>
    %cst_69 = arith.constant 3.200000e+01 : f32
    %179 = vector.broadcast %cst_69 : f32 to vector<18x1xf32>
    %180 = arith.divf %178, %179 : vector<18x1xf32>
    %181 = vector.broadcast %180 : vector<18x1xf32> to vector<18x32xf32>
    %182 = arith.subf %176, %181 : vector<18x32xf32>
    %183 = arith.mulf %182, %182 : vector<18x32xf32>
    %cst_70 = arith.constant dense<0.000000e+00> : vector<18xf32>
    %184 = vector.multi_reduction <add>, %183, %cst_70 [1] : vector<18x32xf32> to vector<18xf32>
    %185 = vector.shape_cast %184 : vector<18xf32> to vector<18x1xf32>
    %cst_71 = arith.constant 3.200000e+01 : f32
    %186 = vector.broadcast %cst_71 : f32 to vector<18x1xf32>
    %187 = arith.divf %185, %186 : vector<18x1xf32>
    %188 = vector.broadcast %180 : vector<18x1xf32> to vector<18x32xf32>
    %189 = arith.subf %176, %188 : vector<18x32xf32>
    %cst_72 = arith.constant 9.99999974E-6 : f32
    %190 = vector.broadcast %cst_72 : f32 to vector<18x1xf32>
    %191 = arith.addf %187, %190 : vector<18x1xf32>
    %192 = math.rsqrt %191 : vector<18x1xf32>
    %193 = vector.broadcast %192 : vector<18x1xf32> to vector<18x32xf32>
    %194 = arith.mulf %189, %193 : vector<18x32xf32>
    %195 = vector.broadcast %9 : vector<1x32xf32> to vector<18x32xf32>
    %196 = arith.mulf %194, %195 : vector<18x32xf32>
    %197 = vector.broadcast %10 : vector<1x32xf32> to vector<18x32xf32>
    %198 = arith.addf %196, %197 : vector<18x32xf32>
    %cst_73 = arith.constant dense<0.000000e+00> : vector<18x64xf32>
    %199 = tpu.matmul %198, %3, %cst_73 {dimension_numbers = #tpu.dot_dimension_numbers<[1], [0], [0], [1], [0, 0, 1, 1], [], []>} : vector<18x32xf32>, vector<32x64xf32>, vector<18x64xf32> -> vector<18x64xf32>
    %200 = vector.broadcast %11 : vector<1x64xf32> to vector<18x64xf32>
    %201 = arith.addf %199, %200 : vector<18x64xf32>
    %cst_74 = arith.constant 0.000000e+00 : f32
    %202 = vector.broadcast %cst_74 : f32 to vector<18x64xf32>
    %203 = arith.maximumf %201, %202 : vector<18x64xf32>
    %cst_75 = arith.constant dense<0.000000e+00> : vector<18x32xf32>
    %204 = tpu.matmul %203, %4, %cst_75 {dimension_numbers = #tpu.dot_dimension_numbers<[1], [0], [0], [1], [0, 0, 1, 1], [], []>} : vector<18x64xf32>, vector<64x32xf32>, vector<18x32xf32> -> vector<18x32xf32>
    %205 = vector.broadcast %12 : vector<1x32xf32> to vector<18x32xf32>
    %206 = arith.addf %204, %205 : vector<18x32xf32>
    %207 = arith.addf %198, %206 : vector<18x32xf32>
    %cst_76 = arith.constant dense<0.000000e+00> : vector<18xf32>
    %208 = vector.multi_reduction <add>, %207, %cst_76 [1] : vector<18x32xf32> to vector<18xf32>
    %209 = vector.shape_cast %208 : vector<18xf32> to vector<18x1xf32>
    %cst_77 = arith.constant 3.200000e+01 : f32
    %210 = vector.broadcast %cst_77 : f32 to vector<18x1xf32>
    %211 = arith.divf %209, %210 : vector<18x1xf32>
    %212 = vector.broadcast %211 : vector<18x1xf32> to vector<18x32xf32>
    %213 = arith.subf %207, %212 : vector<18x32xf32>
    %214 = arith.mulf %213, %213 : vector<18x32xf32>
    %cst_78 = arith.constant dense<0.000000e+00> : vector<18xf32>
    %215 = vector.multi_reduction <add>, %214, %cst_78 [1] : vector<18x32xf32> to vector<18xf32>
    %216 = vector.shape_cast %215 : vector<18xf32> to vector<18x1xf32>
    %cst_79 = arith.constant 3.200000e+01 : f32
    %217 = vector.broadcast %cst_79 : f32 to vector<18x1xf32>
    %218 = arith.divf %216, %217 : vector<18x1xf32>
    %219 = vector.broadcast %211 : vector<18x1xf32> to vector<18x32xf32>
    %220 = arith.subf %207, %219 : vector<18x32xf32>
    %cst_80 = arith.constant 9.99999974E-6 : f32
    %221 = vector.broadcast %cst_80 : f32 to vector<18x1xf32>
    %222 = arith.addf %218, %221 : vector<18x1xf32>
    %223 = math.rsqrt %222 : vector<18x1xf32>
    %224 = vector.broadcast %223 : vector<18x1xf32> to vector<18x32xf32>
    %225 = arith.mulf %220, %224 : vector<18x32xf32>
    %226 = vector.broadcast %13 : vector<1x32xf32> to vector<18x32xf32>
    %227 = arith.mulf %225, %226 : vector<18x32xf32>
    %228 = vector.broadcast %14 : vector<1x32xf32> to vector<18x32xf32>
    %229 = arith.addf %227, %228 : vector<18x32xf32>
    %230 = vector.extract_strided_slice %229 {offsets = [0, 0], sizes = [1, 32], strides = [1, 1]} : vector<18x32xf32> to vector<1x32xf32>
    %231 = vector.extract_strided_slice %229 {offsets = [1, 0], sizes = [1, 32], strides = [1, 1]} : vector<18x32xf32> to vector<1x32xf32>
    %232 = tpu.concatenate %230, %231 in 1 : vector<1x32xf32>, vector<1x32xf32> -> vector<1x64xf32>
    %cst_81 = arith.constant dense<0.000000e+00> : vector<1x64xf32>
    %233 = tpu.matmul %232, %5, %cst_81 {dimension_numbers = #tpu.dot_dimension_numbers<[1], [0], [0], [1], [0, 0, 1, 1], [], []>} : vector<1x64xf32>, vector<64x64xf32>, vector<1x64xf32> -> vector<1x64xf32>
    %234 = arith.addf %233, %15 : vector<1x64xf32>
    %c1_82 = arith.constant 1 : index
    %c0_83 = arith.constant 0 : index
    %c0_84 = arith.constant 0 : index
    %235 = vector.load %arg4[%c1_82, %c0_83, %c0_84] : memref<2x1x128xf32, #tpu.memory_space<vmem>>, vector<1x1x64xf32>
    %236 = vector.shape_cast %235 : vector<1x1x64xf32> to vector<1x64xf32>
    %237 = vector.shape_cast %234 : vector<1x64xf32> to vector<1x1x64xf32>
    tpu.vector_store %arg4[%c1_82, %c0_83, %c0_84], %237 {strides = array<i32>} : memref<2x1x128xf32, #tpu.memory_space<vmem>>, vector<1x1x64xf32>,
    %c1_85 = arith.constant 1 : index
    %c0_86 = arith.constant 0 : index
    %c64_87 = arith.constant 64 : index
    %238 = vector.load %arg4[%c1_85, %c0_86, %c64_87] : memref<2x1x128xf32, #tpu.memory_space<vmem>>, vector<1x1x64xf32>
    %239 = vector.shape_cast %238 : vector<1x1x64xf32> to vector<1x64xf32>
    %240 = vector.shape_cast %232 : vector<1x64xf32> to vector<1x1x64xf32>
    tpu.vector_store %arg4[%c1_85, %c0_86, %c64_87], %240 {strides = array<i32>} : memref<2x1x128xf32, #tpu.memory_space<vmem>>, vector<1x1x64xf32>,
    return
  }
  func.func @transform_0(%arg0: i32) -> (i32, i32, i32) {
    %c0_i32 = arith.constant 0 : i32
    %c0_i32_0 = arith.constant 0 : i32
    %c0_i32_1 = arith.constant 0 : i32
    return %arg0, %c0_i32, %c0_i32_0 : i32, i32, i32
  }
  func.func @transform_1(%arg0: i32) -> (i32, i32) {
    %c0_i32 = arith.constant 0 : i32
    %c0_i32_0 = arith.constant 0 : i32
    %c0_i32_1 = arith.constant 0 : i32
    return %c0_i32, %c0_i32_0 : i32, i32
  }
  func.func @transform_2(%arg0: i32) -> (i32, i32) {
    %c0_i32 = arith.constant 0 : i32
    %c0_i32_0 = arith.constant 0 : i32
    %c0_i32_1 = arith.constant 0 : i32
    return %c0_i32, %c0_i32_0 : i32, i32
  }
  func.func @transform_3(%arg0: i32) -> (i32, i32, i32) {
    %c0_i32 = arith.constant 0 : i32
    %c0_i32_0 = arith.constant 0 : i32
    %c0_i32_1 = arith.constant 0 : i32
    return %arg0, %c0_i32, %c0_i32_0 : i32, i32, i32
  }
}

</mosaic_0001>

<llo_original>
// kernel: _lambda_.1
$region0: #{_lambda_.1}
  #allocation0 [shape = 'u32[]', space=smem, size = 0x4, offset = 0x4, fixed_abs, tag = 'smem constant byte address 0x4 - core index']
  #allocation1 [shape = 'u32[144,128]{1,0:T(1,128)}', space=vmem, size = 0x12000, scoped, tag = 'internal scratch']
  %s0 = inlined_call_operand.vmem [shape: f32[2,16,48], index: 0, kind: input, shape index: {}]
  %s1 = inlined_call_operand.vmem [shape: f32[272,128], index: 1, kind: input, shape index: {}]
  %s2 = inlined_call_operand.vmem [shape: f32[16,128], index: 2, kind: input, shape index: {}]
  %s3 = inlined_call_operand.vmem [shape: f32[2,1,128], index: 3, kind: output, shape index: {}]
  %s4 = sld [smem:[#allocation0]]
  $region22: #{_lambda_.1} parent=0
    _
  %s6 = ssub.s32 1, %s4
  %s7 = scalar_select 0, %s6, %s4
  // Predicated region
  $region2: #{_lambda_.1} parent=0 // pred_check
    _
  $region3: #{_lambda_.1} parent=0 // pred_check_branch
    %9 = sbr.rel (0) target = $region5
  $region4: #{_lambda_.1} parent=0 // pred_region
    _
  $region5: #{_lambda_.1} parent=0 // pred_fallthru
    _
  // Predicated region
  $region6: #{_lambda_.1} parent=0 // pred_check
    _
  $region7: #{_lambda_.1} parent=0 // pred_check_branch
    %11 = sbr.rel (0) target = $region9
  $region8: #{_lambda_.1} parent=0 // pred_region
    _
  $region9: #{_lambda_.1} parent=0 // pred_fallthru
    _
  // Predicated region
  $region10: #{_lambda_.1} parent=0 // pred_check
    _
  $region11: #{_lambda_.1} parent=0 // pred_check_branch
    %13 = sbr.rel (0) target = $region13
  $region12: #{_lambda_.1} parent=0 // pred_region
    _
  $region13: #{_lambda_.1} parent=0 // pred_fallthru
    _
  %v14 = vld [vmem:[%s1] sm:$0xff]
  %v15 = vld [vmem:[%s1 + $0x8] sm:$0xff]
  %v16 = vld [vmem:[%s1 + $0x10] sm:$0xff]
  %v17 = vld [vmem:[%s1 + $0x18] sm:$0xff]
  %v18 = vld [vmem:[%s1 + $0x20] sm:$0xff]
  %v19 = vld [vmem:[%s1 + $0x28] sm:$0xff]
  %v20 = vld [vmem:[%s1 + $0x30] sm:$0xff]
  %v21 = vld [vmem:[%s1 + $0x38] sm:$0xff]
  %v22 = vld [vmem:[%s1 + $0x40] sm:$0xff]
  %v23 = vld [vmem:[%s1 + $0x48] sm:$0xff]
  %v24 = vld [vmem:[%s1 + $0x50] sm:$0xff]
  %v25 = vld [vmem:[%s1 + $0x58] sm:$0xff]
  %v26 = vld [vmem:[%s1 + $0x60] sm:$0xff]
  %v27 = vld [vmem:[%s1 + $0x68] sm:$0xff]
  %v28 = vld [vmem:[%s1 + $0x70] sm:$0xff]
  %v29 = vld [vmem:[%s1 + $0x78] sm:$0xff]
  %v30 = vld [vmem:[%s1 + $0x80] sm:$0xff]
  %v31 = vld [vmem:[%s1 + $0x88] sm:$0xff]
  %v32 = vld [vmem:[%s1 + $0x90] sm:$0xff]
  %v33 = vld [vmem:[%s1 + $0x98] sm:$0xff]
  %v34 = vld [vmem:[%s1 + $0xa0] sm:$0xff]
  %v35 = vld [vmem:[%s1 + $0xa8] sm:$0xff]
  %v36 = vld [vmem:[%s1 + $0xb0] sm:$0xff]
  %v37 = vld [vmem:[%s1 + $0xb8] sm:$0xff]
  %v38 = vld [vmem:[%s1 + $0xc0] sm:$0xff]
  %v39 = vld [vmem:[%s1 + $0xc8] sm:$0xff]
  %v40 = vld [vmem:[%s1 + $0xd0] sm:$0xff]
  %v41 = vld [vmem:[%s1 + $0xd8] sm:$0xff]
  %v42 = vld [vmem:[%s1 + $0xe0] sm:$0xff]
  %v43 = vld [vmem:[%s1 + $0xe8] sm:$0xff]
  %v44 = vld [vmem:[%s1 + $0xf0] sm:$0xff]
  %v45 = vld [vmem:[%s1 + $0xf8] sm:$0xff]
  %v46 = vld [vmem:[%s1 + $0x100] sm:$0xff]
  %v47 = vld [vmem:[%s1 + $0x108] sm:$0xff]
  %v48 = vld [vmem:[%s2] sm:$0x1]
  %v49 = vld [vmem:[%s2 + $0x1] sm:$0x1]
  %v50 = vld [vmem:[%s2 + $0x2] sm:$0x1]
  %v51 = vld [vmem:[%s2 + $0x3] sm:$0x1]
  %v52 = vld [vmem:[%s2 + $0x4] sm:$0x1]
  %v53 = vld [vmem:[%s2 + $0x5] sm:$0x1]
  %v54 = vld [vmem:[%s2 + $0x6] sm:$0x1]
  %v55 = vld [vmem:[%s2 + $0x7] sm:$0x1]
  %v56 = vld [vmem:[%s2 + $0x8] sm:$0x1]
  %v57 = vld [vmem:[%s2 + $0x9] sm:$0x1]
  %v58 = vld [vmem:[%s2 + $0xa] sm:$0x3]
  %v59 = vld [vmem:[%s0] sm:$0xff]
  %v60 = vld [vmem:[%s0 + $0x8] sm:$0xff]
  %v61 = vlaneseq
  %v62 = vshrl.u32 %v61, 7
  %v63 = vsub.s32 0, %v62
  %v64 = vrot.slane %v48, %v63
  %vm65 = vcmask 392192
  %v67 = vsel %vm65, %v59, 0
  %v70 = vsel %vm65, %v60, 0
  %72 = vmatprep.subr.mxu0 0.0
  %73 = vmatpush1.msra.mxu0 %v14
  %74 = vmatprep.subr.mxu0 0.0
  %75 = vmatpush1.msra.mxu0 %v15
  %76 = vmatprep.subr.mxu0 0.0
  %77 = vmatpush1.msra.mxu0 %v16
  %78 = vmatprep.subr.mxu0 0.0
  %79 = vmatpush1.msra.mxu0 %v17
  %80 = vmatprep.subr.mxu0 0.0
  %81 = vmatpush1.msra.mxu0 %v18
  %82 = vmatprep.subr.mxu0 0.0
  %83 = vmatpush1.msra.mxu0 %v19
  %84 = vmatprep.subr.mxu0 0.0
  %85 = vmatpush1.msra.mxu0 0.0
  %86 = vmatprep.subr.mxu0 0.0
  %87 = vmatpush1.msra.mxu0 0.0
  %88 = vmatprep.subr.mxu0 0.0
  %89 = vmatpush1.msra.mxu0 0.0
  %90 = vmatprep.subr.mxu0 0.0
  %91 = vmatpush1.msra.mxu0 0.0
  %92 = vmatprep.subr.mxu0 0.0
  %93 = vmatpush1.msra.mxu0 0.0
  %94 = vmatprep.subr.mxu0 0.0
  %95 = vmatpush1.msra.mxu0 0.0
  %96 = vmatprep.subr.mxu0 0.0
  %97 = vmatpush1.msra.mxu0 0.0
  %98 = vmatprep.subr.mxu0 0.0
  %99 = vmatpush1.msra.mxu0 0.0
  %100 = vmatprep.subr.mxu0 0.0
  %101 = vmatpush1.msra.mxu0 0.0
  %102 = vmatprep.subr.mxu0 0.0
  %103 = vmatpush1.msra.mxu0 0.0
  %104 = vmatprep.subr.mxu0 0.0
  %105 = vmatpush1.msra.mxu0 0.0
  %106 = vmatprep.subr.mxu0 0.0
  %107 = vmatpush1.msra.mxu0 0.0
  %108 = vmatprep.subr.mxu0 0.0
  %109 = vmatpush1.msra.mxu0 0.0
  %110 = vmatprep.subr.mxu0 0.0
  %111 = vmatpush1.msra.mxu0 0.0
  %112 = vmatprep.subr.mxu0 0.0
  %113 = vmatpush1.msra.mxu0 0.0
  %114 = vmatprep.subr.mxu0 0.0
  %115 = vmatpush1.msra.mxu0 0.0
  %116 = vmatprep.subr.mxu0 0.0
  %117 = vmatpush1.msra.mxu0 0.0
  %118 = vmatprep.subr.mxu0 0.0
  %119 = vmatpush1.msra.mxu0 0.0
  %120 = vmatprep.subr.mxu0 0.0
  %121 = vmatpush1.msra.mxu0 0.0
  %122 = vmatprep.subr.mxu0 0.0
  %123 = vmatpush1.msra.mxu0 0.0
  %124 = vmatprep.subr.mxu0 0.0
  %125 = vmatpush1.msra.mxu0 0.0
  %126 = vmatprep.subr.mxu0 0.0
  %127 = vmatpush1.msra.mxu0 0.0
  %128 = vmatprep.subr.mxu0 0.0
  %129 = vmatpush1.msra.mxu0 0.0
  %130 = vmatprep.subr.mxu0 0.0
  %131 = vmatpush1.msra.mxu0 0.0
  %132 = vmatprep.subr.mxu0 0.0
  %133 = vmatpush1.msra.mxu0 0.0
  %134 = vmatprep.subr.mxu0 0.0
  %135 = vmatpush1.msra.mxu0 0.0
  %136 = vmatprep.mubr.f32.mxu0 0.0
  %137 = vmatmul.mubr.f32.gmra.mrb[0].mxu0 %v67
  %v138 = vpop.f32.mrb[0].mxu0
  %v139 = vadd.f32 %v64, %v138
  %v140 = vpop.f32.mrb[0].mxu0
  %141 = vmatprep.mubr.f32.mxu0 0.0
  %142 = vmatmul.mubr.f32.gmra.mrb[0].mxu0 %v70
  %v143 = vpop.f32.mrb[0].mxu0
  %v144 = vadd.f32 %v64, %v143
  %v145 = vpop.f32.mrb[0].mxu0
  %146 = vdwg.mxu0
  %vm149 = vcmask 1041408
  %v150 = vrot.slane %v139, 6
  %v151 = vrot.slane %v144, 6
  %v152 = vsel %vm149, %v150, %v151
  %v156 = vsel %vm149, %v58, %v150
  %v157 = vlaneseq
  %v158 = vshrl.u32 %v157, 7
  %v159 = vsub.s32 0, %v158
  %v160 = vrot.slane %v49, %v159
  %vm161 = vcmask 261120
  %v163 = vsel %vm161, %v156, 0
  %v165 = vsel %vm161, %v152, 0
  %v167 = vsel %vm161, %v151, 0
  %169 = vmatprep.subr.mxu0 0.0
  %170 = vmatpush1.msra.mxu0 %v20
  %171 = vmatprep.subr.mxu0 0.0
  %172 = vmatpush1.msra.mxu0 %v21
  %173 = vmatprep.subr.mxu0 0.0
  %174 = vmatpush1.msra.mxu0 %v22
  %175 = vmatprep.subr.mxu0 0.0
  %176 = vmatpush1.msra.mxu0 %v23
  %177 = vmatprep.subr.mxu0 0.0
  %178 = vmatpush1.msra.mxu0 0.0
  %179 = vmatprep.subr.mxu0 0.0
  %180 = vmatpush1.msra.mxu0 0.0
  %181 = vmatprep.subr.mxu0 0.0
  %182 = vmatpush1.msra.mxu0 0.0
  %183 = vmatprep.subr.mxu0 0.0
  %184 = vmatpush1.msra.mxu0 0.0
  %185 = vmatprep.subr.mxu0 0.0
  %186 = vmatpush1.msra.mxu0 0.0
  %187 = vmatprep.subr.mxu0 0.0
  %188 = vmatpush1.msra.mxu0 0.0
  %189 = vmatprep.subr.mxu0 0.0
  %190 = vmatpush1.msra.mxu0 0.0
  %191 = vmatprep.subr.mxu0 0.0
  %192 = vmatpush1.msra.mxu0 0.0
  %193 = vmatprep.subr.mxu0 0.0
  %194 = vmatpush1.msra.mxu0 0.0
  %195 = vmatprep.subr.mxu0 0.0
  %196 = vmatpush1.msra.mxu0 0.0
  %197 = vmatprep.subr.mxu0 0.0
  %198 = vmatpush1.msra.mxu0 0.0
  %199 = vmatprep.subr.mxu0 0.0
  %200 = vmatpush1.msra.mxu0 0.0
  %201 = vmatprep.subr.mxu0 0.0
  %202 = vmatpush1.msra.mxu0 0.0
  %203 = vmatprep.subr.mxu0 0.0
  %204 = vmatpush1.msra.mxu0 0.0
  %205 = vmatprep.subr.mxu0 0.0
  %206 = vmatpush1.msra.mxu0 0.0
  %207 = vmatprep.subr.mxu0 0.0
  %208 = vmatpush1.msra.mxu0 0.0
  %209 = vmatprep.subr.mxu0 0.0
  %210 = vmatpush1.msra.mxu0 0.0
  %211 = vmatprep.subr.mxu0 0.0
  %212 = vmatpush1.msra.mxu0 0.0
  %213 = vmatprep.subr.mxu0 0.0
  %214 = vmatpush1.msra.mxu0 0.0
  %215 = vmatprep.subr.mxu0 0.0
  %216 = vmatpush1.msra.mxu0 0.0
  %217 = vmatprep.subr.mxu0 0.0
  %218 = vmatpush1.msra.mxu0 0.0
  %219 = vmatprep.subr.mxu0 0.0
  %220 = vmatpush1.msra.mxu0 0.0
  %221 = vmatprep.subr.mxu0 0.0
  %222 = vmatpush1.msra.mxu0 0.0
  %223 = vmatprep.subr.mxu0 0.0
  %224 = vmatpush1.msra.mxu0 0.0
  %225 = vmatprep.subr.mxu0 0.0
  %226 = vmatpush1.msra.mxu0 0.0
  %227 = vmatprep.subr.mxu0 0.0
  %228 = vmatpush1.msra.mxu0 0.0
  %229 = vmatprep.subr.mxu0 0.0
  %230 = vmatpush1.msra.mxu0 0.0
  %231 = vmatprep.subr.mxu0 0.0
  %232 = vmatpush1.msra.mxu0 0.0
  %233 = vmatprep.mubr.f32.mxu0 0.0
  %234 = vmatmul.mubr.f32.gmra.mrb[0].mxu0 %v163
  %v235 = vpop.f32.mrb[0].mxu0
  %v236 = vadd.f32 %v160, %v235
  %v237 = vpop.f32.mrb[0].mxu0
  %238 = vmatprep.mubr.f32.mxu0 0.0
  %239 = vmatmul.mubr.f32.gmra.mrb[0].mxu0 %v165
  %v240 = vpop.f32.mrb[0].mxu0
  %v241 = vadd.f32 %v160, %v240
  %v242 = vpop.f32.mrb[0].mxu0
  %243 = vmatprep.mubr.f32.mxu0 0.0
  %244 = vmatmul.mubr.f32.gmra.mrb[0].mxu0 %v167
  %v245 = vpop.f32.mrb[0].mxu0
  %v246 = vadd.f32 %v160, %v245
  %v247 = vpop.f32.mrb[0].mxu0
  %248 = vdwg.mxu0
  %252 = vrot.lane.b32.xlu0 %v236, 96
  %v253 = vpop.permute.xlu0 %252
  %254 = vrot.lane.b32.xlu0 %v241, 96
  %v255 = vpop.permute.xlu0 %254
  %256 = vrot.lane.b32.xlu0 %v246, 96
  %v257 = vpop.permute.xlu0 %256
  %vm258 = vcmask 130048
  %v259 = vsel %vm258, %v236, 0
  %v261 = vsel %vm258, %v241, 0
  %v263 = vsel %vm258, %v246, 0
  %v265 = vsel %vm258, %v253, 0
  %v267 = vsel %vm258, %v255, 0
  %v269 = vsel %vm258, %v257, 0
  %271 = vmatprep.subr.mxu0 0.0
  %272 = vmatpush1.xpose.msra.mxu0 %v265
  %273 = vmatprep.subr.mxu0 0.0
  %274 = vmatpush1.xpose.msra.mxu0 %v267
  %275 = vmatprep.subr.mxu0 0.0
  %276 = vmatpush1.xpose.msra.mxu0 %v269
  %277 = vmatprep.subr.mxu0 0.0
  %278 = vmatpush1.xpose.msra.mxu0 0.0
  %279 = vmatprep.subr.mxu0 0.0
  %280 = vmatpush1.xpose.msra.mxu0 0.0
  %281 = vmatprep.subr.mxu0 0.0
  %282 = vmatpush1.xpose.msra.mxu0 0.0
  %283 = vmatprep.subr.mxu0 0.0
  %284 = vmatpush1.xpose.msra.mxu0 0.0
  %285 = vmatprep.subr.mxu0 0.0
  %286 = vmatpush1.xpose.msra.mxu0 0.0
  %287 = vmatprep.subr.mxu0 0.0
  %288 = vmatpush1.xpose.msra.mxu0 0.0
  %289 = vmatprep.subr.mxu0 0.0
  %290 = vmatpush1.xpose.msra.mxu0 0.0
  %291 = vmatprep.subr.mxu0 0.0
  %292 = vmatpush1.xpose.msra.mxu0 0.0
  %293 = vmatprep.subr.mxu0 0.0
  %294 = vmatpush1.xpose.msra.mxu0 0.0
  %295 = vmatprep.subr.mxu0 0.0
  %296 = vmatpush1.xpose.msra.mxu0 0.0
  %297 = vmatprep.subr.mxu0 0.0
  %298 = vmatpush1.xpose.msra.mxu0 0.0
  %299 = vmatprep.subr.mxu0 0.0
  %300 = vmatpush1.xpose.msra.mxu0 0.0
  %301 = vmatprep.subr.mxu0 0.0
  %302 = vmatpush1.xpose.msra.mxu0 0.0
  %303 = vmatprep.subr.mxu0 0.0
  %304 = vmatpush1.xpose.msra.mxu0 0.0
  %305 = vmatprep.subr.mxu0 0.0
  %306 = vmatpush1.xpose.msra.mxu0 0.0
  %307 = vmatprep.subr.mxu0 0.0
  %308 = vmatpush1.xpose.msra.mxu0 0.0
  %309 = vmatprep.subr.mxu0 0.0
  %310 = vmatpush1.xpose.msra.mxu0 0.0
  %311 = vmatprep.subr.mxu0 0.0
  %312 = vmatpush1.xpose.msra.mxu0 0.0
  %313 = vmatprep.subr.mxu0 0.0
  %314 = vmatpush1.xpose.msra.mxu0 0.0
  %315 = vmatprep.subr.mxu0 0.0
  %316 = vmatpush1.xpose.msra.mxu0 0.0
  %317 = vmatprep.subr.mxu0 0.0
  %318 = vmatpush1.xpose.msra.mxu0 0.0
  %319 = vmatprep.subr.mxu0 0.0
  %320 = vmatpush1.xpose.msra.mxu0 0.0
  %321 = vmatprep.subr.mxu0 0.0
  %322 = vmatpush1.xpose.msra.mxu0 0.0
  %323 = vmatprep.subr.mxu0 0.0
  %324 = vmatpush1.xpose.msra.mxu0 0.0
  %325 = vmatprep.subr.mxu0 0.0
  %326 = vmatpush1.xpose.msra.mxu0 0.0
  %327 = vmatprep.subr.mxu0 0.0
  %328 = vmatpush1.xpose.msra.mxu0 0.0
  %329 = vmatprep.subr.mxu0 0.0
  %330 = vmatpush1.xpose.msra.mxu0 0.0
  %331 = vmatprep.subr.mxu0 0.0
  %332 = vmatpush1.xpose.msra.mxu0 0.0
  %333 = vmatprep.subr.mxu0 0.0
  %334 = vmatpush1.xpose.msra.mxu0 0.0
  %335 = vmatprep.mubr.f32.mxu0 0.0
  %336 = vmatmul.mubr.f32.gmra.mrb[0].mxu0 %v259
  %v337 = vpop.f32.mrb[0].mxu0
  %v338 = vadd.f32 0.0, %v337
  %v339 = vpop.f32.mrb[0].mxu0
  %340 = vmatprep.mubr.f32.mxu0 0.0
  %341 = vmatmul.mubr.f32.gmra.mrb[0].mxu0 %v261
  %v342 = vpop.f32.mrb[0].mxu0
  %v343 = vadd.f32 0.0, %v342
  %v344 = vpop.f32.mrb[0].mxu0
  %345 = vmatprep.mubr.f32.mxu0 0.0
  %346 = vmatmul.mubr.f32.gmra.mrb[0].mxu0 %v263
  %v347 = vpop.f32.mrb[0].mxu0
  %v348 = vadd.f32 0.0, %v347
  %v349 = vpop.f32.mrb[0].mxu0
  %350 = vdwg.mxu0
  %v351 = vmul.f32 %v338, 0.25
  %v352 = vmul.f32 %v343, 0.25
  %v353 = vmul.f32 %v348, 0.25
  %vm354 = vcmask 146432
  %v355 = vsel %vm354, %v351, -inf
  %356 = vmax.xlane.f32.xlu0 %v355
  %v357 = vpop.xlane.xlu0 %356
  %v358 = vsel %vm354, %v352, -inf
  %359 = vmax.xlane.f32.xlu0 %v358
  %v360 = vpop.xlane.xlu0 %359
  %vm361 = vcmask 140288
  %v362 = vsel %vm361, %v353, -inf
  %363 = vmax.xlane.f32.xlu0 %v362
  %v364 = vpop.xlane.xlu0 %363
  %v365 = vsub.f32 %v351, %v357
  %v366 = vsub.f32 %v352, %v360
  %v367 = vsub.f32 %v353, %v364
  %v368 = vmul.f32 %v365, 1.442695
  %v369 = vpow.pop %v368
  %v370 = vmul.f32 %v366, 1.442695
  %v371 = vpow.pop %v370
  %v372 = vmul.f32 %v367, 1.442695
  %v373 = vpow.pop %v372
  %v374 = vsel %vm354, %v369, 0.0
  %375 = vadd.xlane.f32.xlu0 %v374
  %v376 = vpop.xlane.xlu0 %375
  %v377 = vsel %vm354, %v371, 0.0
  %378 = vadd.xlane.f32.xlu0 %v377
  %v379 = vpop.xlane.xlu0 %378
  %v380 = vsel %vm361, %v373, 0.0
  %381 = vadd.xlane.f32.xlu0 %v380
  %v382 = vpop.xlane.xlu0 %381
  %v383 = vrcp.pop %v376
  %v384 = vrcp.pop %v379
  %v385 = vrcp.pop %v382
  %v386 = vmul.f32 %v369, %v383
  %v387 = vmul.f32 %v371, %v384
  %v388 = vmul.f32 %v373, %v385
  %389 = vrot.lane.b32.xlu0 %v236, 64
  %v390 = vpop.permute.xlu0 %389
  %391 = vrot.lane.b32.xlu0 %v241, 64
  %v392 = vpop.permute.xlu0 %391
  %393 = vrot.lane.b32.xlu0 %v246, 64
  %v394 = vpop.permute.xlu0 %393
  %v398 = vsel %vm354, %v386, 0
  %v401 = vsel %vm354, %v387, 0
  %v404 = vsel %vm354, %v388, 0
  %v406 = vsel %vm149, %v394, 0
  %408 = vmatprep.subr.mxu0 0.0
  %409 = vmatpush1.msra.mxu0 %v390
  %410 = vmatprep.subr.mxu0 0.0
  %411 = vmatpush1.msra.mxu0 %v392
  %412 = vmatprep.subr.mxu0 0.0
  %413 = vmatpush1.msra.mxu0 %v406
  %414 = vmatprep.subr.mxu0 0.0
  %415 = vmatpush1.msra.mxu0 0.0
  %416 = vmatprep.subr.mxu0 0.0
  %417 = vmatpush1.msra.mxu0 0.0
  %418 = vmatprep.subr.mxu0 0.0
  %419 = vmatpush1.msra.mxu0 0.0
  %420 = vmatprep.subr.mxu0 0.0
  %421 = vmatpush1.msra.mxu0 0.0
  %422 = vmatprep.subr.mxu0 0.0
  %423 = vmatpush1.msra.mxu0 0.0
  %424 = vmatprep.subr.mxu0 0.0
  %425 = vmatpush1.msra.mxu0 0.0
  %426 = vmatprep.subr.mxu0 0.0
  %427 = vmatpush1.msra.mxu0 0.0
  %428 = vmatprep.subr.mxu0 0.0
  %429 = vmatpush1.msra.mxu0 0.0
  %430 = vmatprep.subr.mxu0 0.0
  %431 = vmatpush1.msra.mxu0 0.0
  %432 = vmatprep.subr.mxu0 0.0
  %433 = vmatpush1.msra.mxu0 0.0
  %434 = vmatprep.subr.mxu0 0.0
  %435 = vmatpush1.msra.mxu0 0.0
  %436 = vmatprep.subr.mxu0 0.0
  %437 = vmatpush1.msra.mxu0 0.0
  %438 = vmatprep.subr.mxu0 0.0
  %439 = vmatpush1.msra.mxu0 0.0
  %440 = vmatprep.subr.mxu0 0.0
  %441 = vmatpush1.msra.mxu0 0.0
  %442 = vmatprep.subr.mxu0 0.0
  %443 = vmatpush1.msra.mxu0 0.0
  %444 = vmatprep.subr.mxu0 0.0
  %445 = vmatpush1.msra.mxu0 0.0
  %446 = vmatprep.subr.mxu0 0.0
  %447 = vmatpush1.msra.mxu0 0.0
  %448 = vmatprep.subr.mxu0 0.0
  %449 = vmatpush1.msra.mxu0 0.0
  %450 = vmatprep.subr.mxu0 0.0
  %451 = vmatpush1.msra.mxu0 0.0
  %452 = vmatprep.subr.mxu0 0.0
  %453 = vmatpush1.msra.mxu0 0.0
  %454 = vmatprep.subr.mxu0 0.0
  %455 = vmatpush1.msra.mxu0 0.0
  %456 = vmatprep.subr.mxu0 0.0
  %457 = vmatpush1.msra.mxu0 0.0
  %458 = vmatprep.subr.mxu0 0.0
  %459 = vmatpush1.msra.mxu0 0.0
  %460 = vmatprep.subr.mxu0 0.0
  %461 = vmatpush1.msra.mxu0 0.0
  %462 = vmatprep.subr.mxu0 0.0
  %463 = vmatpush1.msra.mxu0 0.0
  %464 = vmatprep.subr.mxu0 0.0
  %465 = vmatpush1.msra.mxu0 0.0
  %466 = vmatprep.subr.mxu0 0.0
  %467 = vmatpush1.msra.mxu0 0.0
  %468 = vmatprep.subr.mxu0 0.0
  %469 = vmatpush1.msra.mxu0 0.0
  %470 = vmatprep.subr.mxu0 0.0
  %471 = vmatpush1.msra.mxu0 0.0
  %472 = vmatprep.mubr.f32.mxu0 0.0
  %473 = vmatmul.mubr.f32.gmra.mrb[0].mxu0 %v398
  %v474 = vpop.f32.mrb[0].mxu0
  %v475 = vadd.f32 0.0, %v474
  %v476 = vpop.f32.mrb[0].mxu0
  %477 = vmatprep.mubr.f32.mxu0 0.0
  %478 = vmatmul.mubr.f32.gmra.mrb[0].mxu0 %v401
  %v479 = vpop.f32.mrb[0].mxu0
  %v480 = vadd.f32 0.0, %v479
  %v481 = vpop.f32.mrb[0].mxu0
  %482 = vmatprep.mubr.f32.mxu0 0.0
  %483 = vmatmul.mubr.f32.gmra.mrb[0].mxu0 %v404
  %v484 = vpop.f32.mrb[0].mxu0
  %v485 = vadd.f32 0.0, %v484
  %v486 = vpop.f32.mrb[0].mxu0
  %487 = vdwg.mxu0
  %488 = vrot.lane.b32.xlu0 %v236, 112
  %v489 = vpop.permute.xlu0 %488
  %490 = vrot.lane.b32.xlu0 %v241, 112
  %v491 = vpop.permute.xlu0 %490
  %492 = vrot.lane.b32.xlu0 %v246, 112
  %v493 = vpop.permute.xlu0 %492
  %494 = vrot.lane.b32.xlu0 %v236, 80
  %v495 = vpop.permute.xlu0 %494
  %496 = vrot.lane.b32.xlu0 %v241, 80
  %v497 = vpop.permute.xlu0 %496
  %498 = vrot.lane.b32.xlu0 %v246, 80
  %v499 = vpop.permute.xlu0 %498
  %v500 = vsel %vm258, %v489, 0
  %v502 = vsel %vm258, %v491, 0
  %v504 = vsel %vm258, %v493, 0
  %v506 = vsel %vm258, %v495, 0
  %v508 = vsel %vm258, %v497, 0
  %v510 = vsel %vm258, %v499, 0
  %512 = vmatprep.subr.mxu0 0.0
  %513 = vmatpush1.xpose.msra.mxu0 %v506
  %514 = vmatprep.subr.mxu0 0.0
  %515 = vmatpush1.xpose.msra.mxu0 %v508
  %516 = vmatprep.subr.mxu0 0.0
  %517 = vmatpush1.xpose.msra.mxu0 %v510
  %518 = vmatprep.subr.mxu0 0.0
  %519 = vmatpush1.xpose.msra.mxu0 0.0
  %520 = vmatprep.subr.mxu0 0.0
  %521 = vmatpush1.xpose.msra.mxu0 0.0
  %522 = vmatprep.subr.mxu0 0.0
  %523 = vmatpush1.xpose.msra.mxu0 0.0
  %524 = vmatprep.subr.mxu0 0.0
  %525 = vmatpush1.xpose.msra.mxu0 0.0
  %526 = vmatprep.subr.mxu0 0.0
  %527 = vmatpush1.xpose.msra.mxu0 0.0
  %528 = vmatprep.subr.mxu0 0.0
  %529 = vmatpush1.xpose.msra.mxu0 0.0
  %530 = vmatprep.subr.mxu0 0.0
  %531 = vmatpush1.xpose.msra.mxu0 0.0
  %532 = vmatprep.subr.mxu0 0.0
  %533 = vmatpush1.xpose.msra.mxu0 0.0
  %534 = vmatprep.subr.mxu0 0.0
  %535 = vmatpush1.xpose.msra.mxu0 0.0
  %536 = vmatprep.subr.mxu0 0.0
  %537 = vmatpush1.xpose.msra.mxu0 0.0
  %538 = vmatprep.subr.mxu0 0.0
  %539 = vmatpush1.xpose.msra.mxu0 0.0
  %540 = vmatprep.subr.mxu0 0.0
  %541 = vmatpush1.xpose.msra.mxu0 0.0
  %542 = vmatprep.subr.mxu0 0.0
  %543 = vmatpush1.xpose.msra.mxu0 0.0
  %544 = vmatprep.subr.mxu0 0.0
  %545 = vmatpush1.xpose.msra.mxu0 0.0
  %546 = vmatprep.subr.mxu0 0.0
  %547 = vmatpush1.xpose.msra.mxu0 0.0
  %548 = vmatprep.subr.mxu0 0.0
  %549 = vmatpush1.xpose.msra.mxu0 0.0
  %550 = vmatprep.subr.mxu0 0.0
  %551 = vmatpush1.xpose.msra.mxu0 0.0
  %552 = vmatprep.subr.mxu0 0.0
  %553 = vmatpush1.xpose.msra.mxu0 0.0
  %554 = vmatprep.subr.mxu0 0.0
  %555 = vmatpush1.xpose.msra.mxu0 0.0
  %556 = vmatprep.subr.mxu0 0.0
  %557 = vmatpush1.xpose.msra.mxu0 0.0
  %558 = vmatprep.subr.mxu0 0.0
  %559 = vmatpush1.xpose.msra.mxu0 0.0
  %560 = vmatprep.subr.mxu0 0.0
  %561 = vmatpush1.xpose.msra.mxu0 0.0
  %562 = vmatprep.subr.mxu0 0.0
  %563 = vmatpush1.xpose.msra.mxu0 0.0
  %564 = vmatprep.subr.mxu0 0.0
  %565 = vmatpush1.xpose.msra.mxu0 0.0
  %566 = vmatprep.subr.mxu0 0.0
  %567 = vmatpush1.xpose.msra.mxu0 0.0
  %568 = vmatprep.subr.mxu0 0.0
  %569 = vmatpush1.xpose.msra.mxu0 0.0
  %570 = vmatprep.subr.mxu0 0.0
  %571 = vmatpush1.xpose.msra.mxu0 0.0
  %572 = vmatprep.subr.mxu0 0.0
  %573 = vmatpush1.xpose.msra.mxu0 0.0
  %574 = vmatprep.subr.mxu0 0.0
  %575 = vmatpush1.xpose.msra.mxu0 0.0
  %576 = vmatprep.mubr.f32.mxu0 0.0
  %577 = vmatmul.mubr.f32.gmra.mrb[0].mxu0 %v500
  %v578 = vpop.f32.mrb[0].mxu0
  %v579 = vadd.f32 0.0, %v578
  %v580 = vpop.f32.mrb[0].mxu0
  %581 = vmatprep.mubr.f32.mxu0 0.0
  %582 = vmatmul.mubr.f32.gmra.mrb[0].mxu0 %v502
  %v583 = vpop.f32.mrb[0].mxu0
  %v584 = vadd.f32 0.0, %v583
  %v585 = vpop.f32.mrb[0].mxu0
  %586 = vmatprep.mubr.f32.mxu0 0.0
  %587 = vmatmul.mubr.f32.gmra.mrb[0].mxu0 %v504
  %v588 = vpop.f32.mrb[0].mxu0
  %v589 = vadd.f32 0.0, %v588
  %v590 = vpop.f32.mrb[0].mxu0
  %591 = vdwg.mxu0
  %v592 = vmul.f32 %v579, 0.25
  %v593 = vmul.f32 %v584, 0.25
  %v594 = vmul.f32 %v589, 0.25
  %v595 = vsel %vm354, %v592, -inf
  %596 = vmax.xlane.f32.xlu0 %v595
  %v597 = vpop.xlane.xlu0 %596
  %v598 = vsel %vm354, %v593, -inf
  %599 = vmax.xlane.f32.xlu0 %v598
  %v600 = vpop.xlane.xlu0 %599
  %v601 = vsel %vm361, %v594, -inf
  %602 = vmax.xlane.f32.xlu0 %v601
  %v603 = vpop.xlane.xlu0 %602
  %v604 = vsub.f32 %v592, %v597
  %v605 = vsub.f32 %v593, %v600
  %v606 = vsub.f32 %v594, %v603
  %v607 = vmul.f32 %v604, 1.442695
  %v608 = vpow.pop %v607
  %v609 = vmul.f32 %v605, 1.442695
  %v610 = vpow.pop %v609
  %v611 = vmul.f32 %v606, 1.442695
  %v612 = vpow.pop %v611
  %v613 = vsel %vm354, %v608, 0.0
  %614 = vadd.xlane.f32.xlu0 %v613
  %v615 = vpop.xlane.xlu0 %614
  %v616 = vsel %vm354, %v610, 0.0
  %617 = vadd.xlane.f32.xlu0 %v616
  %v618 = vpop.xlane.xlu0 %617
  %v619 = vsel %vm361, %v612, 0.0
  %620 = vadd.xlane.f32.xlu0 %v619
  %v621 = vpop.xlane.xlu0 %620
  %v622 = vrcp.pop %v615
  %v623 = vrcp.pop %v618
  %v624 = vrcp.pop %v621
  %v625 = vmul.f32 %v608, %v622
  %v626 = vmul.f32 %v610, %v623
  %v627 = vmul.f32 %v612, %v624
  %628 = vrot.lane.b32.xlu0 %v236, 48
  %v629 = vpop.permute.xlu0 %628
  %630 = vrot.lane.b32.xlu0 %v241, 48
  %v631 = vpop.permute.xlu0 %630
  %632 = vrot.lane.b32.xlu0 %v246, 48
  %v633 = vpop.permute.xlu0 %632
  %v637 = vsel %vm354, %v625, 0
  %v640 = vsel %vm354, %v626, 0
  %v643 = vsel %vm354, %v627, 0
  %v645 = vsel %vm149, %v633, 0
  %647 = vmatprep.subr.mxu0 0.0
  %648 = vmatpush1.msra.mxu0 %v629
  %649 = vmatprep.subr.mxu0 0.0
  %650 = vmatpush1.msra.mxu0 %v631
  %651 = vmatprep.subr.mxu0 0.0
  %652 = vmatpush1.msra.mxu0 %v645
  %653 = vmatprep.subr.mxu0 0.0
  %654 = vmatpush1.msra.mxu0 0.0
  %655 = vmatprep.subr.mxu0 0.0
  %656 = vmatpush1.msra.mxu0 0.0
  %657 = vmatprep.subr.mxu0 0.0
  %658 = vmatpush1.msra.mxu0 0.0
  %659 = vmatprep.subr.mxu0 0.0
  %660 = vmatpush1.msra.mxu0 0.0
  %661 = vmatprep.subr.mxu0 0.0
  %662 = vmatpush1.msra.mxu0 0.0
  %663 = vmatprep.subr.mxu0 0.0
  %664 = vmatpush1.msra.mxu0 0.0
  %665 = vmatprep.subr.mxu0 0.0
  %666 = vmatpush1.msra.mxu0 0.0
  %667 = vmatprep.subr.mxu0 0.0
  %668 = vmatpush1.msra.mxu0 0.0
  %669 = vmatprep.subr.mxu0 0.0
  %670 = vmatpush1.msra.mxu0 0.0
  %671 = vmatprep.subr.mxu0 0.0
  %672 = vmatpush1.msra.mxu0 0.0
  %673 = vmatprep.subr.mxu0 0.0
  %674 = vmatpush1.msra.mxu0 0.0
  %675 = vmatprep.subr.mxu0 0.0
  %676 = vmatpush1.msra.mxu0 0.0
  %677 = vmatprep.subr.mxu0 0.0
  %678 = vmatpush1.msra.mxu0 0.0
  %679 = vmatprep.subr.mxu0 0.0
  %680 = vmatpush1.msra.mxu0 0.0
  %681 = vmatprep.subr.mxu0 0.0
  %682 = vmatpush1.msra.mxu0 0.0
  %683 = vmatprep.subr.mxu0 0.0
  %684 = vmatpush1.msra.mxu0 0.0
  %685 = vmatprep.subr.mxu0 0.0
  %686 = vmatpush1.msra.mxu0 0.0
  %687 = vmatprep.subr.mxu0 0.0
  %688 = vmatpush1.msra.mxu0 0.0
  %689 = vmatprep.subr.mxu0 0.0
  %690 = vmatpush1.msra.mxu0 0.0
  %691 = vmatprep.subr.mxu0 0.0
  %692 = vmatpush1.msra.mxu0 0.0
  %693 = vmatprep.subr.mxu0 0.0
  %694 = vmatpush1.msra.mxu0 0.0
  %695 = vmatprep.subr.mxu0 0.0
  %696 = vmatpush1.msra.mxu0 0.0
  %697 = vmatprep.subr.mxu0 0.0
  %698 = vmatpush1.msra.mxu0 0.0
  %699 = vmatprep.subr.mxu0 0.0
  %700 = vmatpush1.msra.mxu0 0.0
  %701 = vmatprep.subr.mxu0 0.0
  %702 = vmatpush1.msra.mxu0 0.0
  %703 = vmatprep.subr.mxu0 0.0
  %704 = vmatpush1.msra.mxu0 0.0
  %705 = vmatprep.subr.mxu0 0.0
  %706 = vmatpush1.msra.mxu0 0.0
  %707 = vmatprep.subr.mxu0 0.0
  %708 = vmatpush1.msra.mxu0 0.0
  %709 = vmatprep.subr.mxu0 0.0
  %710 = vmatpush1.msra.mxu0 0.0
  %711 = vmatprep.mubr.f32.mxu0 0.0
  %712 = vmatmul.mubr.f32.gmra.mrb[0].mxu0 %v637
  %v713 = vpop.f32.mrb[0].mxu0
  %v714 = vadd.f32 0.0, %v713
  %v715 = vpop.f32.mrb[0].mxu0
  %716 = vmatprep.mubr.f32.mxu0 0.0
  %717 = vmatmul.mubr.f32.gmra.mrb[0].mxu0 %v640
  %v718 = vpop.f32.mrb[0].mxu0
  %v719 = vadd.f32 0.0, %v718
  %v720 = vpop.f32.mrb[0].mxu0
  %721 = vmatprep.mubr.f32.mxu0 0.0
  %722 = vmatmul.mubr.f32.gmra.mrb[0].mxu0 %v643
  %v723 = vpop.f32.mrb[0].mxu0
  %v724 = vadd.f32 0.0, %v723
  %v725 = vpop.f32.mrb[0].mxu0
  %726 = vdwg.mxu0
  %730 = vrot.lane.b32.xlu0 %v714, 16
  %v731 = vpop.permute.xlu0 %730
  %732 = vrot.lane.b32.xlu0 %v719, 16
  %v733 = vpop.permute.xlu0 %732
  %734 = vrot.lane.b32.xlu0 %v724, 16
  %v735 = vpop.permute.xlu0 %734
  %v739 = vsel %vm258, %v475, %v731
  %v740 = vsel %vm258, %v480, %v733
  %v741 = vsel %vm258, %v485, %v735
  %v742 = vlaneseq
  %v743 = vshrl.u32 %v742, 7
  %v744 = vsub.s32 0, %v743
  %v745 = vrot.slane %v50, %v744
  %v747 = vsel %vm161, %v739, 0
  %v750 = vsel %vm161, %v740, 0
  %v753 = vsel %vm161, %v741, 0
  %755 = vmatprep.subr.mxu0 0.0
  %756 = vmatpush1.msra.mxu0 %v24
  %757 = vmatprep.subr.mxu0 0.0
  %758 = vmatpush1.msra.mxu0 %v25
  %759 = vmatprep.subr.mxu0 0.0
  %760 = vmatpush1.msra.mxu0 %v26
  %761 = vmatprep.subr.mxu0 0.0
  %762 = vmatpush1.msra.mxu0 %v27
  %763 = vmatprep.subr.mxu0 0.0
  %764 = vmatpush1.msra.mxu0 0.0
  %765 = vmatprep.subr.mxu0 0.0
  %766 = vmatpush1.msra.mxu0 0.0
  %767 = vmatprep.subr.mxu0 0.0
  %768 = vmatpush1.msra.mxu0 0.0
  %769 = vmatprep.subr.mxu0 0.0
  %770 = vmatpush1.msra.mxu0 0.0
  %771 = vmatprep.subr.mxu0 0.0
  %772 = vmatpush1.msra.mxu0 0.0
  %773 = vmatprep.subr.mxu0 0.0
  %774 = vmatpush1.msra.mxu0 0.0
  %775 = vmatprep.subr.mxu0 0.0
  %776 = vmatpush1.msra.mxu0 0.0
  %777 = vmatprep.subr.mxu0 0.0
  %778 = vmatpush1.msra.mxu0 0.0
  %779 = vmatprep.subr.mxu0 0.0
  %780 = vmatpush1.msra.mxu0 0.0
  %781 = vmatprep.subr.mxu0 0.0
  %782 = vmatpush1.msra.mxu0 0.0
  %783 = vmatprep.subr.mxu0 0.0
  %784 = vmatpush1.msra.mxu0 0.0
  %785 = vmatprep.subr.mxu0 0.0
  %786 = vmatpush1.msra.mxu0 0.0
  %787 = vmatprep.subr.mxu0 0.0
  %788 = vmatpush1.msra.mxu0 0.0
  %789 = vmatprep.subr.mxu0 0.0
  %790 = vmatpush1.msra.mxu0 0.0
  %791 = vmatprep.subr.mxu0 0.0
  %792 = vmatpush1.msra.mxu0 0.0
  %793 = vmatprep.subr.mxu0 0.0
  %794 = vmatpush1.msra.mxu0 0.0
  %795 = vmatprep.subr.mxu0 0.0
  %796 = vmatpush1.msra.mxu0 0.0
  %797 = vmatprep.subr.mxu0 0.0
  %798 = vmatpush1.msra.mxu0 0.0
  %799 = vmatprep.subr.mxu0 0.0
  %800 = vmatpush1.msra.mxu0 0.0
  %801 = vmatprep.subr.mxu0 0.0
  %802 = vmatpush1.msra.mxu0 0.0
  %803 = vmatprep.subr.mxu0 0.0
  %804 = vmatpush1.msra.mxu0 0.0
  %805 = vmatprep.subr.mxu0 0.0
  %806 = vmatpush1.msra.mxu0 0.0
  %807 = vmatprep.subr.mxu0 0.0
  %808 = vmatpush1.msra.mxu0 0.0
  %809 = vmatprep.subr.mxu0 0.0
  %810 = vmatpush1.msra.mxu0 0.0
  %811 = vmatprep.subr.mxu0 0.0
  %812 = vmatpush1.msra.mxu0 0.0
  %813 = vmatprep.subr.mxu0 0.0
  %814 = vmatpush1.msra.mxu0 0.0
  %815 = vmatprep.subr.mxu0 0.0
  %816 = vmatpush1.msra.mxu0 0.0
  %817 = vmatprep.subr.mxu0 0.0
  %818 = vmatpush1.msra.mxu0 0.0
  %819 = vmatprep.mubr.f32.mxu0 0.0
  %820 = vmatmul.mubr.f32.gmra.mrb[0].mxu0 %v747
  %v821 = vpop.f32.mrb[0].mxu0
  %v822 = vadd.f32 %v745, %v821
  %v823 = vpop.f32.mrb[0].mxu0
  %824 = vmatprep.mubr.f32.mxu0 0.0
  %825 = vmatmul.mubr.f32.gmra.mrb[0].mxu0 %v750
  %v826 = vpop.f32.mrb[0].mxu0
  %v827 = vadd.f32 %v745, %v826
  %v828 = vpop.f32.mrb[0].mxu0
  %829 = vmatprep.mubr.f32.mxu0 0.0
  %830 = vmatmul.mubr.f32.gmra.mrb[0].mxu0 %v753
  %v831 = vpop.f32.mrb[0].mxu0
  %v832 = vadd.f32 %v745, %v831
  %v833 = vpop.f32.mrb[0].mxu0
  %834 = vdwg.mxu0
  %v835 = vadd.f32 %v156, %v822
  %v836 = vadd.f32 %v152, %v827
  %v837 = vadd.f32 %v151, %v832
  %v838 = vsel %vm161, %v835, 0.0
  %839 = vadd.xlane.f32.xlu0 %v838
  %v840 = vpop.xlane.xlu0 %839
  %v841 = vsel %vm161, %v836, 0.0
  %842 = vadd.xlane.f32.xlu0 %v841
  %v843 = vpop.xlane.xlu0 %842
  %vm844 = vcmask 254976
  %v845 = vsel %vm844, %v837, 0.0
  %846 = vadd.xlane.f32.xlu0 %v845
  %v847 = vpop.xlane.xlu0 %846
  %v848 = vrcp.pop 32.0
  %v849 = vmul.f32 %v840, %v848
  %v850 = vmul.f32 %v843, %v848
  %v851 = vmul.f32 %v847, %v848
  %v852 = vsub.f32 %v835, %v849
  %v853 = vsub.f32 %v836, %v850
  %v854 = vsub.f32 %v837, %v851
  %v855 = vmul.f32 %v852, %v852
  %v856 = vmul.f32 %v853, %v853
  %v857 = vmul.f32 %v854, %v854
  %v858 = vsel %vm161, %v855, 0.0
  %859 = vadd.xlane.f32.xlu0 %v858
  %v860 = vpop.xlane.xlu0 %859
  %v861 = vsel %vm161, %v856, 0.0
  %862 = vadd.xlane.f32.xlu0 %v861
  %v863 = vpop.xlane.xlu0 %862
  %v864 = vsel %vm844, %v857, 0.0
  %865 = vadd.xlane.f32.xlu0 %v864
  %v866 = vpop.xlane.xlu0 %865
  %v867 = vmul.f32 %v860, %v848
  %v868 = vmul.f32 %v863, %v848
  %v869 = vmul.f32 %v866, %v848
  %v870 = vadd.f32 %v867, 1e-05
  %v871 = vadd.f32 %v868, 1e-05
  %v872 = vadd.f32 %v869, 1e-05
  %v873 = vrsqrt.pop %v870
  %v874 = vrsqrt.pop %v871
  %v875 = vrsqrt.pop %v872
  %v876 = vmul.f32 %v852, %v873
  %v877 = vmul.f32 %v853, %v874
  %v878 = vmul.f32 %v854, %v875
  %v879 = vlaneseq
  %v880 = vshrl.u32 %v879, 7
  %v881 = vsub.s32 0, %v880
  %v882 = vrot.slane %v51, %v881
  %v883 = vmul.f32 %v876, %v882
  %v884 = vmul.f32 %v877, %v882
  %v885 = vmul.f32 %v878, %v882
  %v886 = vlaneseq
  %v887 = vshrl.u32 %v886, 7
  %v888 = vsub.s32 0, %v887
  %v889 = vrot.slane %v52, %v888
  %v890 = vadd.f32 %v883, %v889
  %v891 = vadd.f32 %v884, %v889
  %v892 = vadd.f32 %v885, %v889
  %v893 = vlaneseq
  %v894 = vshrl.u32 %v893, 7
  %v895 = vsub.s32 0, %v894
  %v896 = vrot.slane %v53, %v895
  %v898 = vsel %vm161, %v890, 0
  %v901 = vsel %vm161, %v891, 0
  %v904 = vsel %vm161, %v892, 0
  %906 = vmatprep.subr.mxu0 0.0
  %907 = vmatpush1.msra.mxu0 %v28
  %908 = vmatprep.subr.mxu0 0.0
  %909 = vmatpush1.msra.mxu0 %v29
  %910 = vmatprep.subr.mxu0 0.0
  %911 = vmatpush1.msra.mxu0 %v30
  %912 = vmatprep.subr.mxu0 0.0
  %913 = vmatpush1.msra.mxu0 %v31
  %914 = vmatprep.subr.mxu0 0.0
  %915 = vmatpush1.msra.mxu0 0.0
  %916 = vmatprep.subr.mxu0 0.0
  %917 = vmatpush1.msra.mxu0 0.0
  %918 = vmatprep.subr.mxu0 0.0
  %919 = vmatpush1.msra.mxu0 0.0
  %920 = vmatprep.subr.mxu0 0.0
  %921 = vmatpush1.msra.mxu0 0.0
  %922 = vmatprep.subr.mxu0 0.0
  %923 = vmatpush1.msra.mxu0 0.0
  %924 = vmatprep.subr.mxu0 0.0
  %925 = vmatpush1.msra.mxu0 0.0
  %926 = vmatprep.subr.mxu0 0.0
  %927 = vmatpush1.msra.mxu0 0.0
  %928 = vmatprep.subr.mxu0 0.0
  %929 = vmatpush1.msra.mxu0 0.0
  %930 = vmatprep.subr.mxu0 0.0
  %931 = vmatpush1.msra.mxu0 0.0
  %932 = vmatprep.subr.mxu0 0.0
  %933 = vmatpush1.msra.mxu0 0.0
  %934 = vmatprep.subr.mxu0 0.0
  %935 = vmatpush1.msra.mxu0 0.0
  %936 = vmatprep.subr.mxu0 0.0
  %937 = vmatpush1.msra.mxu0 0.0
  %938 = vmatprep.subr.mxu0 0.0
  %939 = vmatpush1.msra.mxu0 0.0
  %940 = vmatprep.subr.mxu0 0.0
  %941 = vmatpush1.msra.mxu0 0.0
  %942 = vmatprep.subr.mxu0 0.0
  %943 = vmatpush1.msra.mxu0 0.0
  %944 = vmatprep.subr.mxu0 0.0
  %945 = vmatpush1.msra.mxu0 0.0
  %946 = vmatprep.subr.mxu0 0.0
  %947 = vmatpush1.msra.mxu0 0.0
  %948 = vmatprep.subr.mxu0 0.0
  %949 = vmatpush1.msra.mxu0 0.0
  %950 = vmatprep.subr.mxu0 0.0
  %951 = vmatpush1.msra.mxu0 0.0
  %952 = vmatprep.subr.mxu0 0.0
  %953 = vmatpush1.msra.mxu0 0.0
  %954 = vmatprep.subr.mxu0 0.0
  %955 = vmatpush1.msra.mxu0 0.0
  %956 = vmatprep.subr.mxu0 0.0
  %957 = vmatpush1.msra.mxu0 0.0
  %958 = vmatprep.subr.mxu0 0.0
  %959 = vmatpush1.msra.mxu0 0.0
  %960 = vmatprep.subr.mxu0 0.0
  %961 = vmatpush1.msra.mxu0 0.0
  %962 = vmatprep.subr.mxu0 0.0
  %963 = vmatpush1.msra.mxu0 0.0
  %964 = vmatprep.subr.mxu0 0.0
  %965 = vmatpush1.msra.mxu0 0.0
  %966 = vmatprep.subr.mxu0 0.0
  %967 = vmatpush1.msra.mxu0 0.0
  %968 = vmatprep.subr.mxu0 0.0
  %969 = vmatpush1.msra.mxu0 0.0
  %970 = vmatprep.mubr.f32.mxu0 0.0
  %971 = vmatmul.mubr.f32.gmra.mrb[0].mxu0 %v898
  %v972 = vpop.f32.mrb[0].mxu0
  %v973 = vadd.f32 %v896, %v972
  %v974 = vpop.f32.mrb[0].mxu0
  %975 = vmatprep.mubr.f32.mxu0 0.0
  %976 = vmatmul.mubr.f32.gmra.mrb[0].mxu0 %v901
  %v977 = vpop.f32.mrb[0].mxu0
  %v978 = vadd.f32 %v896, %v977
  %v979 = vpop.f32.mrb[0].mxu0
  %980 = vmatprep.mubr.f32.mxu0 0.0
  %981 = vmatmul.mubr.f32.gmra.mrb[0].mxu0 %v904
  %v982 = vpop.f32.mrb[0].mxu0
  %v983 = vadd.f32 %v896, %v982
  %v984 = vpop.f32.mrb[0].mxu0
  %985 = vdwg.mxu0
  %v986 = vmax.f32 %v973, 0.0
  %v987 = vmax.f32 %v978, 0.0
  %v988 = vmax.f32 %v983, 0.0
  %v989 = vlaneseq
  %v990 = vshrl.u32 %v989, 7
  %v991 = vsub.s32 0, %v990
  %v992 = vrot.slane %v54, %v991
  %vm993 = vcmask 523264
  %v995 = vsel %vm993, %v986, 0
  %v998 = vsel %vm993, %v987, 0
  %v1001 = vsel %vm993, %v988, 0
  %1003 = vmatprep.subr.mxu0 0.0
  %1004 = vmatpush1.msra.mxu0 %v32
  %1005 = vmatprep.subr.mxu0 0.0
  %1006 = vmatpush1.msra.mxu0 %v33
  %1007 = vmatprep.subr.mxu0 0.0
  %1008 = vmatpush1.msra.mxu0 %v34
  %1009 = vmatprep.subr.mxu0 0.0
  %1010 = vmatpush1.msra.mxu0 %v35
  %1011 = vmatprep.subr.mxu0 0.0
  %1012 = vmatpush1.msra.mxu0 %v36
  %1013 = vmatprep.subr.mxu0 0.0
  %1014 = vmatpush1.msra.mxu0 %v37
  %1015 = vmatprep.subr.mxu0 0.0
  %1016 = vmatpush1.msra.mxu0 %v38
  %1017 = vmatprep.subr.mxu0 0.0
  %1018 = vmatpush1.msra.mxu0 %v39
  %1019 = vmatprep.subr.mxu0 0.0
  %1020 = vmatpush1.msra.mxu0 0.0
  %1021 = vmatprep.subr.mxu0 0.0
  %1022 = vmatpush1.msra.mxu0 0.0
  %1023 = vmatprep.subr.mxu0 0.0
  %1024 = vmatpush1.msra.mxu0 0.0
  %1025 = vmatprep.subr.mxu0 0.0
  %1026 = vmatpush1.msra.mxu0 0.0
  %1027 = vmatprep.subr.mxu0 0.0
  %1028 = vmatpush1.msra.mxu0 0.0
  %1029 = vmatprep.subr.mxu0 0.0
  %1030 = vmatpush1.msra.mxu0 0.0
  %1031 = vmatprep.subr.mxu0 0.0
  %1032 = vmatpush1.msra.mxu0 0.0
  %1033 = vmatprep.subr.mxu0 0.0
  %1034 = vmatpush1.msra.mxu0 0.0
  %1035 = vmatprep.subr.mxu0 0.0
  %1036 = vmatpush1.msra.mxu0 0.0
  %1037 = vmatprep.subr.mxu0 0.0
  %1038 = vmatpush1.msra.mxu0 0.0
  %1039 = vmatprep.subr.mxu0 0.0
  %1040 = vmatpush1.msra.mxu0 0.0
  %1041 = vmatprep.subr.mxu0 0.0
  %1042 = vmatpush1.msra.mxu0 0.0
  %1043 = vmatprep.subr.mxu0 0.0
  %1044 = vmatpush1.msra.mxu0 0.0
  %1045 = vmatprep.subr.mxu0 0.0
  %1046 = vmatpush1.msra.mxu0 0.0
  %1047 = vmatprep.subr.mxu0 0.0
  %1048 = vmatpush1.msra.mxu0 0.0
  %1049 = vmatprep.subr.mxu0 0.0
  %1050 = vmatpush1.msra.mxu0 0.0
  %1051 = vmatprep.subr.mxu0 0.0
  %1052 = vmatpush1.msra.mxu0 0.0
  %1053 = vmatprep.subr.mxu0 0.0
  %1054 = vmatpush1.msra.mxu0 0.0
  %1055 = vmatprep.subr.mxu0 0.0
  %1056 = vmatpush1.msra.mxu0 0.0
  %1057 = vmatprep.subr.mxu0 0.0
  %1058 = vmatpush1.msra.mxu0 0.0
  %1059 = vmatprep.subr.mxu0 0.0
  %1060 = vmatpush1.msra.mxu0 0.0
  %1061 = vmatprep.subr.mxu0 0.0
  %1062 = vmatpush1.msra.mxu0 0.0
  %1063 = vmatprep.subr.mxu0 0.0
  %1064 = vmatpush1.msra.mxu0 0.0
  %1065 = vmatprep.subr.mxu0 0.0
  %1066 = vmatpush1.msra.mxu0 0.0
  %1067 = vmatprep.mubr.f32.mxu0 0.0
  %1068 = vmatmul.mubr.f32.gmra.mrb[0].mxu0 %v995
  %v1069 = vpop.f32.mrb[0].mxu0
  %v1070 = vadd.f32 %v992, %v1069
  %v1071 = vpop.f32.mrb[0].mxu0
  %1072 = vmatprep.mubr.f32.mxu0 0.0
  %1073 = vmatmul.mubr.f32.gmra.mrb[0].mxu0 %v998
  %v1074 = vpop.f32.mrb[0].mxu0
  %v1075 = vpop.f32.mrb[0].mxu0
  %1076 = vmatprep.mubr.f32.mxu0 0.0
  %1077 = vmatmul.mubr.f32.gmra.mrb[0].mxu0 %v1001
  %v1078 = vpop.f32.mrb[0].mxu0
  %v1079 = vpop.f32.mrb[0].mxu0
  %1080 = vdwg.mxu0
  %v1081 = vadd.f32 %v890, %v1070
  %v1082 = vsel %vm161, %v1081, 0.0
  %1083 = vadd.xlane.f32.xlu0 %v1082
  %v1084 = vpop.xlane.xlu0 %1083
  %v1085 = vmul.f32 %v1084, %v848
  %v1086 = vsub.f32 %v1081, %v1085
  %v1087 = vmul.f32 %v1086, %v1086
  %v1088 = vsel %vm161, %v1087, 0.0
  %1089 = vadd.xlane.f32.xlu0 %v1088
  %v1090 = vpop.xlane.xlu0 %1089
  %v1091 = vmul.f32 %v1090, %v848
  %v1092 = vadd.f32 %v1091, 1e-05
  %v1093 = vrsqrt.pop %v1092
  %v1094 = vmul.f32 %v1086, %v1093
  %v1095 = vlaneseq
  %v1096 = vshrl.u32 %v1095, 7
  %v1097 = vsub.s32 0, %v1096
  %v1098 = vrot.slane %v55, %v1097
  %v1099 = vmul.f32 %v1094, %v1098
  %v1100 = vlaneseq
  %v1101 = vshrl.u32 %v1100, 7
  %v1102 = vsub.s32 0, %v1101
  %v1103 = vrot.slane %v56, %v1102
  %v1104 = vadd.f32 %v1099, %v1103
  %v1106 = vrot.slane %v1104, 1
  %1107 = vrot.lane.b32.xlu0 %v1106, 32
  %v1108 = vpop.permute.xlu0 %1107
  %v1110 = vsel %vm161, %v1104, %v1108
  %v1112 = vsel %vm993, %v1110, 0
  %1114 = vmatprep.subr.mxu0 0.0
  %1115 = vmatpush1.msra.mxu0 %v40
  %1116 = vmatprep.subr.mxu0 0.0
  %1117 = vmatpush1.msra.mxu0 %v41
  %1118 = vmatprep.subr.mxu0 0.0
  %1119 = vmatpush1.msra.mxu0 %v42
  %1120 = vmatprep.subr.mxu0 0.0
  %1121 = vmatpush1.msra.mxu0 %v43
  %1122 = vmatprep.subr.mxu0 0.0
  %1123 = vmatpush1.msra.mxu0 %v44
  %1124 = vmatprep.subr.mxu0 0.0
  %1125 = vmatpush1.msra.mxu0 %v45
  %1126 = vmatprep.subr.mxu0 0.0
  %1127 = vmatpush1.msra.mxu0 %v46
  %1128 = vmatprep.subr.mxu0 0.0
  %1129 = vmatpush1.msra.mxu0 %v47
  %1130 = vmatprep.subr.mxu0 0.0
  %1131 = vmatpush1.msra.mxu0 0.0
  %1132 = vmatprep.subr.mxu0 0.0
  %1133 = vmatpush1.msra.mxu0 0.0
  %1134 = vmatprep.subr.mxu0 0.0
  %1135 = vmatpush1.msra.mxu0 0.0
  %1136 = vmatprep.subr.mxu0 0.0
  %1137 = vmatpush1.msra.mxu0 0.0
  %1138 = vmatprep.subr.mxu0 0.0
  %1139 = vmatpush1.msra.mxu0 0.0
  %1140 = vmatprep.subr.mxu0 0.0
  %1141 = vmatpush1.msra.mxu0 0.0
  %1142 = vmatprep.subr.mxu0 0.0
  %1143 = vmatpush1.msra.mxu0 0.0
  %1144 = vmatprep.subr.mxu0 0.0
  %1145 = vmatpush1.msra.mxu0 0.0
  %1146 = vmatprep.subr.mxu0 0.0
  %1147 = vmatpush1.msra.mxu0 0.0
  %1148 = vmatprep.subr.mxu0 0.0
  %1149 = vmatpush1.msra.mxu0 0.0
  %1150 = vmatprep.subr.mxu0 0.0
  %1151 = vmatpush1.msra.mxu0 0.0
  %1152 = vmatprep.subr.mxu0 0.0
  %1153 = vmatpush1.msra.mxu0 0.0
  %1154 = vmatprep.subr.mxu0 0.0
  %1155 = vmatpush1.msra.mxu0 0.0
  %1156 = vmatprep.subr.mxu0 0.0
  %1157 = vmatpush1.msra.mxu0 0.0
  %1158 = vmatprep.subr.mxu0 0.0
  %1159 = vmatpush1.msra.mxu0 0.0
  %1160 = vmatprep.subr.mxu0 0.0
  %1161 = vmatpush1.msra.mxu0 0.0
  %1162 = vmatprep.subr.mxu0 0.0
  %1163 = vmatpush1.msra.mxu0 0.0
  %1164 = vmatprep.subr.mxu0 0.0
  %1165 = vmatpush1.msra.mxu0 0.0
  %1166 = vmatprep.subr.mxu0 0.0
  %1167 = vmatpush1.msra.mxu0 0.0
  %1168 = vmatprep.subr.mxu0 0.0
  %1169 = vmatpush1.msra.mxu0 0.0
  %1170 = vmatprep.subr.mxu0 0.0
  %1171 = vmatpush1.msra.mxu0 0.0
  %1172 = vmatprep.subr.mxu0 0.0
  %1173 = vmatpush1.msra.mxu0 0.0
  %1174 = vmatprep.subr.mxu0 0.0
  %1175 = vmatpush1.msra.mxu0 0.0
  %1176 = vmatprep.subr.mxu0 0.0
  %1177 = vmatpush1.msra.mxu0 0.0
  %1178 = vmatprep.mubr.f32.mxu0 0.0
  %1179 = vmatmul.mubr.f32.gmra.mrb[0].mxu0 %v1112
  %v1180 = vpop.f32.mrb[0].mxu0
  %v1181 = vadd.f32 %v57, %v1180
  %v1182 = vpop.f32.mrb[0].mxu0
  %1183 = vdwg.mxu0
  %vm1184 = vcmask 516096
  %1185 = vst.msk [vmem:[%s3] sm:$0x1] %vm1184, %v1181
  %1186 = vrot.lane.b32.xlu0 %v1110, 64
  %v1187 = vpop.permute.xlu0 %1186
  %vm1189 = vcmask 1040896
  %1190 = vst.msk [vmem:[%s3] sm:$0x1] %vm1189, %v1187
  %s1191 = scalar_lea.vmem %s0, 16
  %v1192 = vld [vmem:[%s1191] sm:$0xff]
  %v1193 = vld [vmem:[%s1191 + $0x8] sm:$0xff]
  %v1195 = vsel %vm65, %v1192, 0
  %v1198 = vsel %vm65, %v1193, 0
  %1200 = vmatprep.subr.mxu0 0.0
  %1201 = vmatpush1.msra.mxu0 %v14
  %1202 = vmatprep.subr.mxu0 0.0
  %1203 = vmatpush1.msra.mxu0 %v15
  %1204 = vmatprep.subr.mxu0 0.0
  %1205 = vmatpush1.msra.mxu0 %v16
  %1206 = vmatprep.subr.mxu0 0.0
  %1207 = vmatpush1.msra.mxu0 %v17
  %1208 = vmatprep.subr.mxu0 0.0
  %1209 = vmatpush1.msra.mxu0 %v18
  %1210 = vmatprep.subr.mxu0 0.0
  %1211 = vmatpush1.msra.mxu0 %v19
  %1212 = vmatprep.subr.mxu0 0.0
  %1213 = vmatpush1.msra.mxu0 0.0
  %1214 = vmatprep.subr.mxu0 0.0
  %1215 = vmatpush1.msra.mxu0 0.0
  %1216 = vmatprep.subr.mxu0 0.0
  %1217 = vmatpush1.msra.mxu0 0.0
  %1218 = vmatprep.subr.mxu0 0.0
  %1219 = vmatpush1.msra.mxu0 0.0
  %1220 = vmatprep.subr.mxu0 0.0
  %1221 = vmatpush1.msra.mxu0 0.0
  %1222 = vmatprep.subr.mxu0 0.0
  %1223 = vmatpush1.msra.mxu0 0.0
  %1224 = vmatprep.subr.mxu0 0.0
  %1225 = vmatpush1.msra.mxu0 0.0
  %1226 = vmatprep.subr.mxu0 0.0
  %1227 = vmatpush1.msra.mxu0 0.0
  %1228 = vmatprep.subr.mxu0 0.0
  %1229 = vmatpush1.msra.mxu0 0.0
  %1230 = vmatprep.subr.mxu0 0.0
  %1231 = vmatpush1.msra.mxu0 0.0
  %1232 = vmatprep.subr.mxu0 0.0
  %1233 = vmatpush1.msra.mxu0 0.0
  %1234 = vmatprep.subr.mxu0 0.0
  %1235 = vmatpush1.msra.mxu0 0.0
  %1236 = vmatprep.subr.mxu0 0.0
  %1237 = vmatpush1.msra.mxu0 0.0
  %1238 = vmatprep.subr.mxu0 0.0
  %1239 = vmatpush1.msra.mxu0 0.0
  %1240 = vmatprep.subr.mxu0 0.0
  %1241 = vmatpush1.msra.mxu0 0.0
  %1242 = vmatprep.subr.mxu0 0.0
  %1243 = vmatpush1.msra.mxu0 0.0
  %1244 = vmatprep.subr.mxu0 0.0
  %1245 = vmatpush1.msra.mxu0 0.0
  %1246 = vmatprep.subr.mxu0 0.0
  %1247 = vmatpush1.msra.mxu0 0.0
  %1248 = vmatprep.subr.mxu0 0.0
  %1249 = vmatpush1.msra.mxu0 0.0
  %1250 = vmatprep.subr.mxu0 0.0
  %1251 = vmatpush1.msra.mxu0 0.0
  %1252 = vmatprep.subr.mxu0 0.0
  %1253 = vmatpush1.msra.mxu0 0.0
  %1254 = vmatprep.subr.mxu0 0.0
  %1255 = vmatpush1.msra.mxu0 0.0
  %1256 = vmatprep.subr.mxu0 0.0
  %1257 = vmatpush1.msra.mxu0 0.0
  %1258 = vmatprep.subr.mxu0 0.0
  %1259 = vmatpush1.msra.mxu0 0.0
  %1260 = vmatprep.subr.mxu0 0.0
  %1261 = vmatpush1.msra.mxu0 0.0
  %1262 = vmatprep.subr.mxu0 0.0
  %1263 = vmatpush1.msra.mxu0 0.0
  %1264 = vmatprep.mubr.f32.mxu0 0.0
  %1265 = vmatmul.mubr.f32.gmra.mrb[0].mxu0 %v1195
  %v1266 = vpop.f32.mrb[0].mxu0
  %v1267 = vadd.f32 %v64, %v1266
  %v1268 = vpop.f32.mrb[0].mxu0
  %1269 = vmatprep.mubr.f32.mxu0 0.0
  %1270 = vmatmul.mubr.f32.gmra.mrb[0].mxu0 %v1198
  %v1271 = vpop.f32.mrb[0].mxu0
  %v1272 = vadd.f32 %v64, %v1271
  %v1273 = vpop.f32.mrb[0].mxu0
  %1274 = vdwg.mxu0
  %v1277 = vrot.slane %v1267, 6
  %v1278 = vrot.slane %v1272, 6
  %v1279 = vsel %vm149, %v1277, %v1278
  %v1283 = vsel %vm149, %v58, %v1277
  %v1285 = vsel %vm161, %v1283, 0
  %v1287 = vsel %vm161, %v1279, 0
  %v1289 = vsel %vm161, %v1278, 0
  %1291 = vmatprep.subr.mxu0 0.0
  %1292 = vmatpush1.msra.mxu0 %v20
  %1293 = vmatprep.subr.mxu0 0.0
  %1294 = vmatpush1.msra.mxu0 %v21
  %1295 = vmatprep.subr.mxu0 0.0
  %1296 = vmatpush1.msra.mxu0 %v22
  %1297 = vmatprep.subr.mxu0 0.0
  %1298 = vmatpush1.msra.mxu0 %v23
  %1299 = vmatprep.subr.mxu0 0.0
  %1300 = vmatpush1.msra.mxu0 0.0
  %1301 = vmatprep.subr.mxu0 0.0
  %1302 = vmatpush1.msra.mxu0 0.0
  %1303 = vmatprep.subr.mxu0 0.0
  %1304 = vmatpush1.msra.mxu0 0.0
  %1305 = vmatprep.subr.mxu0 0.0
  %1306 = vmatpush1.msra.mxu0 0.0
  %1307 = vmatprep.subr.mxu0 0.0
  %1308 = vmatpush1.msra.mxu0 0.0
  %1309 = vmatprep.subr.mxu0 0.0
  %1310 = vmatpush1.msra.mxu0 0.0
  %1311 = vmatprep.subr.mxu0 0.0
  %1312 = vmatpush1.msra.mxu0 0.0
  %1313 = vmatprep.subr.mxu0 0.0
  %1314 = vmatpush1.msra.mxu0 0.0
  %1315 = vmatprep.subr.mxu0 0.0
  %1316 = vmatpush1.msra.mxu0 0.0
  %1317 = vmatprep.subr.mxu0 0.0
  %1318 = vmatpush1.msra.mxu0 0.0
  %1319 = vmatprep.subr.mxu0 0.0
  %1320 = vmatpush1.msra.mxu0 0.0
  %1321 = vmatprep.subr.mxu0 0.0
  %1322 = vmatpush1.msra.mxu0 0.0
  %1323 = vmatprep.subr.mxu0 0.0
  %1324 = vmatpush1.msra.mxu0 0.0
  %1325 = vmatprep.subr.mxu0 0.0
  %1326 = vmatpush1.msra.mxu0 0.0
  %1327 = vmatprep.subr.mxu0 0.0
  %1328 = vmatpush1.msra.mxu0 0.0
  %1329 = vmatprep.subr.mxu0 0.0
  %1330 = vmatpush1.msra.mxu0 0.0
  %1331 = vmatprep.subr.mxu0 0.0
  %1332 = vmatpush1.msra.mxu0 0.0
  %1333 = vmatprep.subr.mxu0 0.0
  %1334 = vmatpush1.msra.mxu0 0.0
  %1335 = vmatprep.subr.mxu0 0.0
  %1336 = vmatpush1.msra.mxu0 0.0
  %1337 = vmatprep.subr.mxu0 0.0
  %1338 = vmatpush1.msra.mxu0 0.0
  %1339 = vmatprep.subr.mxu0 0.0
  %1340 = vmatpush1.msra.mxu0 0.0
  %1341 = vmatprep.subr.mxu0 0.0
  %1342 = vmatpush1.msra.mxu0 0.0
  %1343 = vmatprep.subr.mxu0 0.0
  %1344 = vmatpush1.msra.mxu0 0.0
  %1345 = vmatprep.subr.mxu0 0.0
  %1346 = vmatpush1.msra.mxu0 0.0
  %1347 = vmatprep.subr.mxu0 0.0
  %1348 = vmatpush1.msra.mxu0 0.0
  %1349 = vmatprep.subr.mxu0 0.0
  %1350 = vmatpush1.msra.mxu0 0.0
  %1351 = vmatprep.subr.mxu0 0.0
  %1352 = vmatpush1.msra.mxu0 0.0
  %1353 = vmatprep.subr.mxu0 0.0
  %1354 = vmatpush1.msra.mxu0 0.0
  %1355 = vmatprep.mubr.f32.mxu0 0.0
  %1356 = vmatmul.mubr.f32.gmra.mrb[0].mxu0 %v1285
  %v1357 = vpop.f32.mrb[0].mxu0
  %v1358 = vadd.f32 %v160, %v1357
  %v1359 = vpop.f32.mrb[0].mxu0
  %1360 = vmatprep.mubr.f32.mxu0 0.0
  %1361 = vmatmul.mubr.f32.gmra.mrb[0].mxu0 %v1287
  %v1362 = vpop.f32.mrb[0].mxu0
  %v1363 = vadd.f32 %v160, %v1362
  %v1364 = vpop.f32.mrb[0].mxu0
  %1365 = vmatprep.mubr.f32.mxu0 0.0
  %1366 = vmatmul.mubr.f32.gmra.mrb[0].mxu0 %v1289
  %v1367 = vpop.f32.mrb[0].mxu0
  %v1368 = vadd.f32 %v160, %v1367
  %v1369 = vpop.f32.mrb[0].mxu0
  %1370 = vdwg.mxu0
  %1374 = vrot.lane.b32.xlu0 %v1358, 96
  %v1375 = vpop.permute.xlu0 %1374
  %1376 = vrot.lane.b32.xlu0 %v1363, 96
  %v1377 = vpop.permute.xlu0 %1376
  %1378 = vrot.lane.b32.xlu0 %v1368, 96
  %v1379 = vpop.permute.xlu0 %1378
  %v1380 = vsel %vm258, %v1358, 0
  %v1382 = vsel %vm258, %v1363, 0
  %v1384 = vsel %vm258, %v1368, 0
  %v1386 = vsel %vm258, %v1375, 0
  %v1388 = vsel %vm258, %v1377, 0
  %v1390 = vsel %vm258, %v1379, 0
  %1392 = vmatprep.subr.mxu0 0.0
  %1393 = vmatpush1.xpose.msra.mxu0 %v1386
  %1394 = vmatprep.subr.mxu0 0.0
  %1395 = vmatpush1.xpose.msra.mxu0 %v1388
  %1396 = vmatprep.subr.mxu0 0.0
  %1397 = vmatpush1.xpose.msra.mxu0 %v1390
  %1398 = vmatprep.subr.mxu0 0.0
  %1399 = vmatpush1.xpose.msra.mxu0 0.0
  %1400 = vmatprep.subr.mxu0 0.0
  %1401 = vmatpush1.xpose.msra.mxu0 0.0
  %1402 = vmatprep.subr.mxu0 0.0
  %1403 = vmatpush1.xpose.msra.mxu0 0.0
  %1404 = vmatprep.subr.mxu0 0.0
  %1405 = vmatpush1.xpose.msra.mxu0 0.0
  %1406 = vmatprep.subr.mxu0 0.0
  %1407 = vmatpush1.xpose.msra.mxu0 0.0
  %1408 = vmatprep.subr.mxu0 0.0
  %1409 = vmatpush1.xpose.msra.mxu0 0.0
  %1410 = vmatprep.subr.mxu0 0.0
  %1411 = vmatpush1.xpose.msra.mxu0 0.0
  %1412 = vmatprep.subr.mxu0 0.0
  %1413 = vmatpush1.xpose.msra.mxu0 0.0
  %1414 = vmatprep.subr.mxu0 0.0
  %1415 = vmatpush1.xpose.msra.mxu0 0.0
  %1416 = vmatprep.subr.mxu0 0.0
  %1417 = vmatpush1.xpose.msra.mxu0 0.0
  %1418 = vmatprep.subr.mxu0 0.0
  %1419 = vmatpush1.xpose.msra.mxu0 0.0
  %1420 = vmatprep.subr.mxu0 0.0
  %1421 = vmatpush1.xpose.msra.mxu0 0.0
  %1422 = vmatprep.subr.mxu0 0.0
  %1423 = vmatpush1.xpose.msra.mxu0 0.0
  %1424 = vmatprep.subr.mxu0 0.0
  %1425 = vmatpush1.xpose.msra.mxu0 0.0
  %1426 = vmatprep.subr.mxu0 0.0
  %1427 = vmatpush1.xpose.msra.mxu0 0.0
  %1428 = vmatprep.subr.mxu0 0.0
  %1429 = vmatpush1.xpose.msra.mxu0 0.0
  %1430 = vmatprep.subr.mxu0 0.0
  %1431 = vmatpush1.xpose.msra.mxu0 0.0
  %1432 = vmatprep.subr.mxu0 0.0
  %1433 = vmatpush1.xpose.msra.mxu0 0.0
  %1434 = vmatprep.subr.mxu0 0.0
  %1435 = vmatpush1.xpose.msra.mxu0 0.0
  %1436 = vmatprep.subr.mxu0 0.0
  %1437 = vmatpush1.xpose.msra.mxu0 0.0
  %1438 = vmatprep.subr.mxu0 0.0
  %1439 = vmatpush1.xpose.msra.mxu0 0.0
  %1440 = vmatprep.subr.mxu0 0.0
  %1441 = vmatpush1.xpose.msra.mxu0 0.0
  %1442 = vmatprep.subr.mxu0 0.0
  %1443 = vmatpush1.xpose.msra.mxu0 0.0
  %1444 = vmatprep.subr.mxu0 0.0
  %1445 = vmatpush1.xpose.msra.mxu0 0.0
  %1446 = vmatprep.subr.mxu0 0.0
  %1447 = vmatpush1.xpose.msra.mxu0 0.0
  %1448 = vmatprep.subr.mxu0 0.0
  %1449 = vmatpush1.xpose.msra.mxu0 0.0
  %1450 = vmatprep.subr.mxu0 0.0
  %1451 = vmatpush1.xpose.msra.mxu0 0.0
  %1452 = vmatprep.subr.mxu0 0.0
  %1453 = vmatpush1.xpose.msra.mxu0 0.0
  %1454 = vmatprep.subr.mxu0 0.0
  %1455 = vmatpush1.xpose.msra.mxu0 0.0
  %1456 = vmatprep.mubr.f32.mxu0 0.0
  %1457 = vmatmul.mubr.f32.gmra.mrb[0].mxu0 %v1380
  %v1458 = vpop.f32.mrb[0].mxu0
  %v1459 = vadd.f32 0.0, %v1458
  %v1460 = vpop.f32.mrb[0].mxu0
  %1461 = vmatprep.mubr.f32.mxu0 0.0
  %1462 = vmatmul.mubr.f32.gmra.mrb[0].mxu0 %v1382
  %v1463 = vpop.f32.mrb[0].mxu0
  %v1464 = vadd.f32 0.0, %v1463
  %v1465 = vpop.f32.mrb[0].mxu0
  %1466 = vmatprep.mubr.f32.mxu0 0.0
  %1467 = vmatmul.mubr.f32.gmra.mrb[0].mxu0 %v1384
  %v1468 = vpop.f32.mrb[0].mxu0
  %v1469 = vadd.f32 0.0, %v1468
  %v1470 = vpop.f32.mrb[0].mxu0
  %1471 = vdwg.mxu0
  %v1472 = vmul.f32 %v1459, 0.25
  %v1473 = vmul.f32 %v1464, 0.25
  %v1474 = vmul.f32 %v1469, 0.25
  %v1475 = vsel %vm354, %v1472, -inf
  %1476 = vmax.xlane.f32.xlu0 %v1475
  %v1477 = vpop.xlane.xlu0 %1476
  %v1478 = vsel %vm354, %v1473, -inf
  %1479 = vmax.xlane.f32.xlu0 %v1478
  %v1480 = vpop.xlane.xlu0 %1479
  %v1481 = vsel %vm361, %v1474, -inf
  %1482 = vmax.xlane.f32.xlu0 %v1481
  %v1483 = vpop.xlane.xlu0 %1482
  %v1484 = vsub.f32 %v1472, %v1477
  %v1485 = vsub.f32 %v1473, %v1480
  %v1486 = vsub.f32 %v1474, %v1483
  %v1487 = vmul.f32 %v1484, 1.442695
  %v1488 = vpow.pop %v1487
  %v1489 = vmul.f32 %v1485, 1.442695
  %v1490 = vpow.pop %v1489
  %v1491 = vmul.f32 %v1486, 1.442695
  %v1492 = vpow.pop %v1491
  %v1493 = vsel %vm354, %v1488, 0.0
  %1494 = vadd.xlane.f32.xlu0 %v1493
  %v1495 = vpop.xlane.xlu0 %1494
  %v1496 = vsel %vm354, %v1490, 0.0
  %1497 = vadd.xlane.f32.xlu0 %v1496
  %v1498 = vpop.xlane.xlu0 %1497
  %v1499 = vsel %vm361, %v1492, 0.0
  %1500 = vadd.xlane.f32.xlu0 %v1499
  %v1501 = vpop.xlane.xlu0 %1500
  %v1502 = vrcp.pop %v1495
  %v1503 = vrcp.pop %v1498
  %v1504 = vrcp.pop %v1501
  %v1505 = vmul.f32 %v1488, %v1502
  %v1506 = vmul.f32 %v1490, %v1503
  %v1507 = vmul.f32 %v1492, %v1504
  %1508 = vrot.lane.b32.xlu0 %v1358, 64
  %v1509 = vpop.permute.xlu0 %1508
  %1510 = vrot.lane.b32.xlu0 %v1363, 64
  %v1511 = vpop.permute.xlu0 %1510
  %1512 = vrot.lane.b32.xlu0 %v1368, 64
  %v1513 = vpop.permute.xlu0 %1512
  %v1517 = vsel %vm354, %v1505, 0
  %v1520 = vsel %vm354, %v1506, 0
  %v1523 = vsel %vm354, %v1507, 0
  %v1525 = vsel %vm149, %v1513, 0
  %1527 = vmatprep.subr.mxu0 0.0
  %1528 = vmatpush1.msra.mxu0 %v1509
  %1529 = vmatprep.subr.mxu0 0.0
  %1530 = vmatpush1.msra.mxu0 %v1511
  %1531 = vmatprep.subr.mxu0 0.0
  %1532 = vmatpush1.msra.mxu0 %v1525
  %1533 = vmatprep.subr.mxu0 0.0
  %1534 = vmatpush1.msra.mxu0 0.0
  %1535 = vmatprep.subr.mxu0 0.0
  %1536 = vmatpush1.msra.mxu0 0.0
  %1537 = vmatprep.subr.mxu0 0.0
  %1538 = vmatpush1.msra.mxu0 0.0
  %1539 = vmatprep.subr.mxu0 0.0
  %1540 = vmatpush1.msra.mxu0 0.0
  %1541 = vmatprep.subr.mxu0 0.0
  %1542 = vmatpush1.msra.mxu0 0.0
  %1543 = vmatprep.subr.mxu0 0.0
  %1544 = vmatpush1.msra.mxu0 0.0
  %1545 = vmatprep.subr.mxu0 0.0
  %1546 = vmatpush1.msra.mxu0 0.0
  %1547 = vmatprep.subr.mxu0 0.0
  %1548 = vmatpush1.msra.mxu0 0.0
  %1549 = vmatprep.subr.mxu0 0.0
  %1550 = vmatpush1.msra.mxu0 0.0
  %1551 = vmatprep.subr.mxu0 0.0
  %1552 = vmatpush1.msra.mxu0 0.0
  %1553 = vmatprep.subr.mxu0 0.0
  %1554 = vmatpush1.msra.mxu0 0.0
  %1555 = vmatprep.subr.mxu0 0.0
  %1556 = vmatpush1.msra.mxu0 0.0
  %1557 = vmatprep.subr.mxu0 0.0
  %1558 = vmatpush1.msra.mxu0 0.0
  %1559 = vmatprep.subr.mxu0 0.0
  %1560 = vmatpush1.msra.mxu0 0.0
  %1561 = vmatprep.subr.mxu0 0.0
  %1562 = vmatpush1.msra.mxu0 0.0
  %1563 = vmatprep.subr.mxu0 0.0
  %1564 = vmatpush1.msra.mxu0 0.0
  %1565 = vmatprep.subr.mxu0 0.0
  %1566 = vmatpush1.msra.mxu0 0.0
  %1567 = vmatprep.subr.mxu0 0.0
  %1568 = vmatpush1.msra.mxu0 0.0
  %1569 = vmatprep.subr.mxu0 0.0
  %1570 = vmatpush1.msra.mxu0 0.0
  %1571 = vmatprep.subr.mxu0 0.0
  %1572 = vmatpush1.msra.mxu0 0.0
  %1573 = vmatprep.subr.mxu0 0.0
  %1574 = vmatpush1.msra.mxu0 0.0
  %1575 = vmatprep.subr.mxu0 0.0
  %1576 = vmatpush1.msra.mxu0 0.0
  %1577 = vmatprep.subr.mxu0 0.0
  %1578 = vmatpush1.msra.mxu0 0.0
  %1579 = vmatprep.subr.mxu0 0.0
  %1580 = vmatpush1.msra.mxu0 0.0
  %1581 = vmatprep.subr.mxu0 0.0
  %1582 = vmatpush1.msra.mxu0 0.0
  %1583 = vmatprep.subr.mxu0 0.0
  %1584 = vmatpush1.msra.mxu0 0.0
  %1585 = vmatprep.subr.mxu0 0.0
  %1586 = vmatpush1.msra.mxu0 0.0
  %1587 = vmatprep.subr.mxu0 0.0
  %1588 = vmatpush1.msra.mxu0 0.0
  %1589 = vmatprep.subr.mxu0 0.0
  %1590 = vmatpush1.msra.mxu0 0.0
  %1591 = vmatprep.mubr.f32.mxu0 0.0
  %1592 = vmatmul.mubr.f32.gmra.mrb[0].mxu0 %v1517
  %v1593 = vpop.f32.mrb[0].mxu0
  %v1594 = vadd.f32 0.0, %v1593
  %v1595 = vpop.f32.mrb[0].mxu0
  %1596 = vmatprep.mubr.f32.mxu0 0.0
  %1597 = vmatmul.mubr.f32.gmra.mrb[0].mxu0 %v1520
  %v1598 = vpop.f32.mrb[0].mxu0
  %v1599 = vadd.f32 0.0, %v1598
  %v1600 = vpop.f32.mrb[0].mxu0
  %1601 = vmatprep.mubr.f32.mxu0 0.0
  %1602 = vmatmul.mubr.f32.gmra.mrb[0].mxu0 %v1523
  %v1603 = vpop.f32.mrb[0].mxu0
  %v1604 = vadd.f32 0.0, %v1603
  %v1605 = vpop.f32.mrb[0].mxu0
  %1606 = vdwg.mxu0
  %1607 = vrot.lane.b32.xlu0 %v1358, 112
  %v1608 = vpop.permute.xlu0 %1607
  %1609 = vrot.lane.b32.xlu0 %v1363, 112
  %v1610 = vpop.permute.xlu0 %1609
  %1611 = vrot.lane.b32.xlu0 %v1368, 112
  %v1612 = vpop.permute.xlu0 %1611
  %1613 = vrot.lane.b32.xlu0 %v1358, 80
  %v1614 = vpop.permute.xlu0 %1613
  %1615 = vrot.lane.b32.xlu0 %v1363, 80
  %v1616 = vpop.permute.xlu0 %1615
  %1617 = vrot.lane.b32.xlu0 %v1368, 80
  %v1618 = vpop.permute.xlu0 %1617
  %v1619 = vsel %vm258, %v1608, 0
  %v1621 = vsel %vm258, %v1610, 0
  %v1623 = vsel %vm258, %v1612, 0
  %v1625 = vsel %vm258, %v1614, 0
  %v1627 = vsel %vm258, %v1616, 0
  %v1629 = vsel %vm258, %v1618, 0
  %1631 = vmatprep.subr.mxu0 0.0
  %1632 = vmatpush1.xpose.msra.mxu0 %v1625
  %1633 = vmatprep.subr.mxu0 0.0
  %1634 = vmatpush1.xpose.msra.mxu0 %v1627
  %1635 = vmatprep.subr.mxu0 0.0
  %1636 = vmatpush1.xpose.msra.mxu0 %v1629
  %1637 = vmatprep.subr.mxu0 0.0
  %1638 = vmatpush1.xpose.msra.mxu0 0.0
  %1639 = vmatprep.subr.mxu0 0.0
  %1640 = vmatpush1.xpose.msra.mxu0 0.0
  %1641 = vmatprep.subr.mxu0 0.0
  %1642 = vmatpush1.xpose.msra.mxu0 0.0
  %1643 = vmatprep.subr.mxu0 0.0
  %1644 = vmatpush1.xpose.msra.mxu0 0.0
  %1645 = vmatprep.subr.mxu0 0.0
  %1646 = vmatpush1.xpose.msra.mxu0 0.0
  %1647 = vmatprep.subr.mxu0 0.0
  %1648 = vmatpush1.xpose.msra.mxu0 0.0
  %1649 = vmatprep.subr.mxu0 0.0
  %1650 = vmatpush1.xpose.msra.mxu0 0.0
  %1651 = vmatprep.subr.mxu0 0.0
  %1652 = vmatpush1.xpose.msra.mxu0 0.0
  %1653 = vmatprep.subr.mxu0 0.0
  %1654 = vmatpush1.xpose.msra.mxu0 0.0
  %1655 = vmatprep.subr.mxu0 0.0
  %1656 = vmatpush1.xpose.msra.mxu0 0.0
  %1657 = vmatprep.subr.mxu0 0.0
  %1658 = vmatpush1.xpose.msra.mxu0 0.0
  %1659 = vmatprep.subr.mxu0 0.0
  %1660 = vmatpush1.xpose.msra.mxu0 0.0
  %1661 = vmatprep.subr.mxu0 0.0
  %1662 = vmatpush1.xpose.msra.mxu0 0.0
  %1663 = vmatprep.subr.mxu0 0.0
  %1664 = vmatpush1.xpose.msra.mxu0 0.0
  %1665 = vmatprep.subr.mxu0 0.0
  %1666 = vmatpush1.xpose.msra.mxu0 0.0
  %1667 = vmatprep.subr.mxu0 0.0
  %1668 = vmatpush1.xpose.msra.mxu0 0.0
  %1669 = vmatprep.subr.mxu0 0.0
  %1670 = vmatpush1.xpose.msra.mxu0 0.0
  %1671 = vmatprep.subr.mxu0 0.0
  %1672 = vmatpush1.xpose.msra.mxu0 0.0
  %1673 = vmatprep.subr.mxu0 0.0
  %1674 = vmatpush1.xpose.msra.mxu0 0.0
  %1675 = vmatprep.subr.mxu0 0.0
  %1676 = vmatpush1.xpose.msra.mxu0 0.0
  %1677 = vmatprep.subr.mxu0 0.0
  %1678 = vmatpush1.xpose.msra.mxu0 0.0
  %1679 = vmatprep.subr.mxu0 0.0
  %1680 = vmatpush1.xpose.msra.mxu0 0.0
  %1681 = vmatprep.subr.mxu0 0.0
  %1682 = vmatpush1.xpose.msra.mxu0 0.0
  %1683 = vmatprep.subr.mxu0 0.0
  %1684 = vmatpush1.xpose.msra.mxu0 0.0
  %1685 = vmatprep.subr.mxu0 0.0
  %1686 = vmatpush1.xpose.msra.mxu0 0.0
  %1687 = vmatprep.subr.mxu0 0.0
  %1688 = vmatpush1.xpose.msra.mxu0 0.0
  %1689 = vmatprep.subr.mxu0 0.0
  %1690 = vmatpush1.xpose.msra.mxu0 0.0
  %1691 = vmatprep.subr.mxu0 0.0
  %1692 = vmatpush1.xpose.msra.mxu0 0.0
  %1693 = vmatprep.subr.mxu0 0.0
  %1694 = vmatpush1.xpose.msra.mxu0 0.0
  %1695 = vmatprep.mubr.f32.mxu0 0.0
  %1696 = vmatmul.mubr.f32.gmra.mrb[0].mxu0 %v1619
  %v1697 = vpop.f32.mrb[0].mxu0
  %v1698 = vadd.f32 0.0, %v1697
  %v1699 = vpop.f32.mrb[0].mxu0
  %1700 = vmatprep.mubr.f32.mxu0 0.0
  %1701 = vmatmul.mubr.f32.gmra.mrb[0].mxu0 %v1621
  %v1702 = vpop.f32.mrb[0].mxu0
  %v1703 = vadd.f32 0.0, %v1702
  %v1704 = vpop.f32.mrb[0].mxu0
  %1705 = vmatprep.mubr.f32.mxu0 0.0
  %1706 = vmatmul.mubr.f32.gmra.mrb[0].mxu0 %v1623
  %v1707 = vpop.f32.mrb[0].mxu0
  %v1708 = vadd.f32 0.0, %v1707
  %v1709 = vpop.f32.mrb[0].mxu0
  %1710 = vdwg.mxu0
  %v1711 = vmul.f32 %v1698, 0.25
  %v1712 = vmul.f32 %v1703, 0.25
  %v1713 = vmul.f32 %v1708, 0.25
  %v1714 = vsel %vm354, %v1711, -inf
  %1715 = vmax.xlane.f32.xlu0 %v1714
  %v1716 = vpop.xlane.xlu0 %1715
  %v1717 = vsel %vm354, %v1712, -inf
  %1718 = vmax.xlane.f32.xlu0 %v1717
  %v1719 = vpop.xlane.xlu0 %1718
  %v1720 = vsel %vm361, %v1713, -inf
  %1721 = vmax.xlane.f32.xlu0 %v1720
  %v1722 = vpop.xlane.xlu0 %1721
  %v1723 = vsub.f32 %v1711, %v1716
  %v1724 = vsub.f32 %v1712, %v1719
  %v1725 = vsub.f32 %v1713, %v1722
  %v1726 = vmul.f32 %v1723, 1.442695
  %v1727 = vpow.pop %v1726
  %v1728 = vmul.f32 %v1724, 1.442695
  %v1729 = vpow.pop %v1728
  %v1730 = vmul.f32 %v1725, 1.442695
  %v1731 = vpow.pop %v1730
  %v1732 = vsel %vm354, %v1727, 0.0
  %1733 = vadd.xlane.f32.xlu0 %v1732
  %v1734 = vpop.xlane.xlu0 %1733
  %v1735 = vsel %vm354, %v1729, 0.0
  %1736 = vadd.xlane.f32.xlu0 %v1735
  %v1737 = vpop.xlane.xlu0 %1736
  %v1738 = vsel %vm361, %v1731, 0.0
  %1739 = vadd.xlane.f32.xlu0 %v1738
  %v1740 = vpop.xlane.xlu0 %1739
  %v1741 = vrcp.pop %v1734
  %v1742 = vrcp.pop %v1737
  %v1743 = vrcp.pop %v1740
  %v1744 = vmul.f32 %v1727, %v1741
  %v1745 = vmul.f32 %v1729, %v1742
  %v1746 = vmul.f32 %v1731, %v1743
  %1747 = vrot.lane.b32.xlu0 %v1358, 48
  %v1748 = vpop.permute.xlu0 %1747
  %1749 = vrot.lane.b32.xlu0 %v1363, 48
  %v1750 = vpop.permute.xlu0 %1749
  %1751 = vrot.lane.b32.xlu0 %v1368, 48
  %v1752 = vpop.permute.xlu0 %1751
  %v1756 = vsel %vm354, %v1744, 0
  %v1759 = vsel %vm354, %v1745, 0
  %v1762 = vsel %vm354, %v1746, 0
  %v1764 = vsel %vm149, %v1752, 0
  %1766 = vmatprep.subr.mxu0 0.0
  %1767 = vmatpush1.msra.mxu0 %v1748
  %1768 = vmatprep.subr.mxu0 0.0
  %1769 = vmatpush1.msra.mxu0 %v1750
  %1770 = vmatprep.subr.mxu0 0.0
  %1771 = vmatpush1.msra.mxu0 %v1764
  %1772 = vmatprep.subr.mxu0 0.0
  %1773 = vmatpush1.msra.mxu0 0.0
  %1774 = vmatprep.subr.mxu0 0.0
  %1775 = vmatpush1.msra.mxu0 0.0
  %1776 = vmatprep.subr.mxu0 0.0
  %1777 = vmatpush1.msra.mxu0 0.0
  %1778 = vmatprep.subr.mxu0 0.0
  %1779 = vmatpush1.msra.mxu0 0.0
  %1780 = vmatprep.subr.mxu0 0.0
  %1781 = vmatpush1.msra.mxu0 0.0
  %1782 = vmatprep.subr.mxu0 0.0
  %1783 = vmatpush1.msra.mxu0 0.0
  %1784 = vmatprep.subr.mxu0 0.0
  %1785 = vmatpush1.msra.mxu0 0.0
  %1786 = vmatprep.subr.mxu0 0.0
  %1787 = vmatpush1.msra.mxu0 0.0
  %1788 = vmatprep.subr.mxu0 0.0
  %1789 = vmatpush1.msra.mxu0 0.0
  %1790 = vmatprep.subr.mxu0 0.0
  %1791 = vmatpush1.msra.mxu0 0.0
  %1792 = vmatprep.subr.mxu0 0.0
  %1793 = vmatpush1.msra.mxu0 0.0
  %1794 = vmatprep.subr.mxu0 0.0
  %1795 = vmatpush1.msra.mxu0 0.0
  %1796 = vmatprep.subr.mxu0 0.0
  %1797 = vmatpush1.msra.mxu0 0.0
  %1798 = vmatprep.subr.mxu0 0.0
  %1799 = vmatpush1.msra.mxu0 0.0
  %1800 = vmatprep.subr.mxu0 0.0
  %1801 = vmatpush1.msra.mxu0 0.0
  %1802 = vmatprep.subr.mxu0 0.0
  %1803 = vmatpush1.msra.mxu0 0.0
  %1804 = vmatprep.subr.mxu0 0.0
  %1805 = vmatpush1.msra.mxu0 0.0
  %1806 = vmatprep.subr.mxu0 0.0
  %1807 = vmatpush1.msra.mxu0 0.0
  %1808 = vmatprep.subr.mxu0 0.0
  %1809 = vmatpush1.msra.mxu0 0.0
  %1810 = vmatprep.subr.mxu0 0.0
  %1811 = vmatpush1.msra.mxu0 0.0
  %1812 = vmatprep.subr.mxu0 0.0
  %1813 = vmatpush1.msra.mxu0 0.0
  %1814 = vmatprep.subr.mxu0 0.0
  %1815 = vmatpush1.msra.mxu0 0.0
  %1816 = vmatprep.subr.mxu0 0.0
  %1817 = vmatpush1.msra.mxu0 0.0
  %1818 = vmatprep.subr.mxu0 0.0
  %1819 = vmatpush1.msra.mxu0 0.0
  %1820 = vmatprep.subr.mxu0 0.0
  %1821 = vmatpush1.msra.mxu0 0.0
  %1822 = vmatprep.subr.mxu0 0.0
  %1823 = vmatpush1.msra.mxu0 0.0
  %1824 = vmatprep.subr.mxu0 0.0
  %1825 = vmatpush1.msra.mxu0 0.0
  %1826 = vmatprep.subr.mxu0 0.0
  %1827 = vmatpush1.msra.mxu0 0.0
  %1828 = vmatprep.subr.mxu0 0.0
  %1829 = vmatpush1.msra.mxu0 0.0
  %1830 = vmatprep.mubr.f32.mxu0 0.0
  %1831 = vmatmul.mubr.f32.gmra.mrb[0].mxu0 %v1756
  %v1832 = vpop.f32.mrb[0].mxu0
  %v1833 = vadd.f32 0.0, %v1832
  %v1834 = vpop.f32.mrb[0].mxu0
  %1835 = vmatprep.mubr.f32.mxu0 0.0
  %1836 = vmatmul.mubr.f32.gmra.mrb[0].mxu0 %v1759
  %v1837 = vpop.f32.mrb[0].mxu0
  %v1838 = vadd.f32 0.0, %v1837
  %v1839 = vpop.f32.mrb[0].mxu0
  %1840 = vmatprep.mubr.f32.mxu0 0.0
  %1841 = vmatmul.mubr.f32.gmra.mrb[0].mxu0 %v1762
  %v1842 = vpop.f32.mrb[0].mxu0
  %v1843 = vadd.f32 0.0, %v1842
  %v1844 = vpop.f32.mrb[0].mxu0
  %1845 = vdwg.mxu0
  %1849 = vrot.lane.b32.xlu0 %v1833, 16
  %v1850 = vpop.permute.xlu0 %1849
  %1851 = vrot.lane.b32.xlu0 %v1838, 16
  %v1852 = vpop.permute.xlu0 %1851
  %1853 = vrot.lane.b32.xlu0 %v1843, 16
  %v1854 = vpop.permute.xlu0 %1853
  %v1858 = vsel %vm258, %v1594, %v1850
  %v1859 = vsel %vm258, %v1599, %v1852
  %v1860 = vsel %vm258, %v1604, %v1854
  %v1862 = vsel %vm161, %v1858, 0
  %v1865 = vsel %vm161, %v1859, 0
  %v1868 = vsel %vm161, %v1860, 0
  %1870 = vmatprep.subr.mxu0 0.0
  %1871 = vmatpush1.msra.mxu0 %v24
  %1872 = vmatprep.subr.mxu0 0.0
  %1873 = vmatpush1.msra.mxu0 %v25
  %1874 = vmatprep.subr.mxu0 0.0
  %1875 = vmatpush1.msra.mxu0 %v26
  %1876 = vmatprep.subr.mxu0 0.0
  %1877 = vmatpush1.msra.mxu0 %v27
  %1878 = vmatprep.subr.mxu0 0.0
  %1879 = vmatpush1.msra.mxu0 0.0
  %1880 = vmatprep.subr.mxu0 0.0
  %1881 = vmatpush1.msra.mxu0 0.0
  %1882 = vmatprep.subr.mxu0 0.0
  %1883 = vmatpush1.msra.mxu0 0.0
  %1884 = vmatprep.subr.mxu0 0.0
  %1885 = vmatpush1.msra.mxu0 0.0
  %1886 = vmatprep.subr.mxu0 0.0
  %1887 = vmatpush1.msra.mxu0 0.0
  %1888 = vmatprep.subr.mxu0 0.0
  %1889 = vmatpush1.msra.mxu0 0.0
  %1890 = vmatprep.subr.mxu0 0.0
  %1891 = vmatpush1.msra.mxu0 0.0
  %1892 = vmatprep.subr.mxu0 0.0
  %1893 = vmatpush1.msra.mxu0 0.0
  %1894 = vmatprep.subr.mxu0 0.0
  %1895 = vmatpush1.msra.mxu0 0.0
  %1896 = vmatprep.subr.mxu0 0.0
  %1897 = vmatpush1.msra.mxu0 0.0
  %1898 = vmatprep.subr.mxu0 0.0
  %1899 = vmatpush1.msra.mxu0 0.0
  %1900 = vmatprep.subr.mxu0 0.0
  %1901 = vmatpush1.msra.mxu0 0.0
  %1902 = vmatprep.subr.mxu0 0.0
  %1903 = vmatpush1.msra.mxu0 0.0
  %1904 = vmatprep.subr.mxu0 0.0
  %1905 = vmatpush1.msra.mxu0 0.0
  %1906 = vmatprep.subr.mxu0 0.0
  %1907 = vmatpush1.msra.mxu0 0.0
  %1908 = vmatprep.subr.mxu0 0.0
  %1909 = vmatpush1.msra.mxu0 0.0
  %1910 = vmatprep.subr.mxu0 0.0
  %1911 = vmatpush1.msra.mxu0 0.0
  %1912 = vmatprep.subr.mxu0 0.0
  %1913 = vmatpush1.msra.mxu0 0.0
  %1914 = vmatprep.subr.mxu0 0.0
  %1915 = vmatpush1.msra.mxu0 0.0
  %1916 = vmatprep.subr.mxu0 0.0
  %1917 = vmatpush1.msra.mxu0 0.0
  %1918 = vmatprep.subr.mxu0 0.0
  %1919 = vmatpush1.msra.mxu0 0.0
  %1920 = vmatprep.subr.mxu0 0.0
  %1921 = vmatpush1.msra.mxu0 0.0
  %1922 = vmatprep.subr.mxu0 0.0
  %1923 = vmatpush1.msra.mxu0 0.0
  %1924 = vmatprep.subr.mxu0 0.0
  %1925 = vmatpush1.msra.mxu0 0.0
  %1926 = vmatprep.subr.mxu0 0.0
  %1927 = vmatpush1.msra.mxu0 0.0
  %1928 = vmatprep.subr.mxu0 0.0
  %1929 = vmatpush1.msra.mxu0 0.0
  %1930 = vmatprep.subr.mxu0 0.0
  %1931 = vmatpush1.msra.mxu0 0.0
  %1932 = vmatprep.subr.mxu0 0.0
  %1933 = vmatpush1.msra.mxu0 0.0
  %1934 = vmatprep.mubr.f32.mxu0 0.0
  %1935 = vmatmul.mubr.f32.gmra.mrb[0].mxu0 %v1862
  %v1936 = vpop.f32.mrb[0].mxu0
  %v1937 = vadd.f32 %v745, %v1936
  %v1938 = vpop.f32.mrb[0].mxu0
  %1939 = vmatprep.mubr.f32.mxu0 0.0
  %1940 = vmatmul.mubr.f32.gmra.mrb[0].mxu0 %v1865
  %v1941 = vpop.f32.mrb[0].mxu0
  %v1942 = vadd.f32 %v745, %v1941
  %v1943 = vpop.f32.mrb[0].mxu0
  %1944 = vmatprep.mubr.f32.mxu0 0.0
  %1945 = vmatmul.mubr.f32.gmra.mrb[0].mxu0 %v1868
  %v1946 = vpop.f32.mrb[0].mxu0
  %v1947 = vadd.f32 %v745, %v1946
  %v1948 = vpop.f32.mrb[0].mxu0
  %1949 = vdwg.mxu0
  %v1950 = vadd.f32 %v1283, %v1937
  %v1951 = vadd.f32 %v1279, %v1942
  %v1952 = vadd.f32 %v1278, %v1947
  %v1953 = vsel %vm161, %v1950, 0.0
  %1954 = vadd.xlane.f32.xlu0 %v1953
  %v1955 = vpop.xlane.xlu0 %1954
  %v1956 = vsel %vm161, %v1951, 0.0
  %1957 = vadd.xlane.f32.xlu0 %v1956
  %v1958 = vpop.xlane.xlu0 %1957
  %v1959 = vsel %vm844, %v1952, 0.0
  %1960 = vadd.xlane.f32.xlu0 %v1959
  %v1961 = vpop.xlane.xlu0 %1960
  %v1962 = vmul.f32 %v1955, %v848
  %v1963 = vmul.f32 %v1958, %v848
  %v1964 = vmul.f32 %v1961, %v848
  %v1965 = vsub.f32 %v1950, %v1962
  %v1966 = vsub.f32 %v1951, %v1963
  %v1967 = vsub.f32 %v1952, %v1964
  %v1968 = vmul.f32 %v1965, %v1965
  %v1969 = vmul.f32 %v1966, %v1966
  %v1970 = vmul.f32 %v1967, %v1967
  %v1971 = vsel %vm161, %v1968, 0.0
  %1972 = vadd.xlane.f32.xlu0 %v1971
  %v1973 = vpop.xlane.xlu0 %1972
  %v1974 = vsel %vm161, %v1969, 0.0
  %1975 = vadd.xlane.f32.xlu0 %v1974
  %v1976 = vpop.xlane.xlu0 %1975
  %v1977 = vsel %vm844, %v1970, 0.0
  %1978 = vadd.xlane.f32.xlu0 %v1977
  %v1979 = vpop.xlane.xlu0 %1978
  %v1980 = vmul.f32 %v1973, %v848
  %v1981 = vmul.f32 %v1976, %v848
  %v1982 = vmul.f32 %v1979, %v848
  %v1983 = vadd.f32 %v1980, 1e-05
  %v1984 = vadd.f32 %v1981, 1e-05
  %v1985 = vadd.f32 %v1982, 1e-05
  %v1986 = vrsqrt.pop %v1983
  %v1987 = vrsqrt.pop %v1984
  %v1988 = vrsqrt.pop %v1985
  %v1989 = vmul.f32 %v1965, %v1986
  %v1990 = vmul.f32 %v1966, %v1987
  %v1991 = vmul.f32 %v1967, %v1988
  %v1992 = vmul.f32 %v1989, %v882
  %v1993 = vmul.f32 %v1990, %v882
  %v1994 = vmul.f32 %v1991, %v882
  %v1995 = vadd.f32 %v1992, %v889
  %v1996 = vadd.f32 %v1993, %v889
  %v1997 = vadd.f32 %v1994, %v889
  %v1999 = vsel %vm161, %v1995, 0
  %v2002 = vsel %vm161, %v1996, 0
  %v2005 = vsel %vm161, %v1997, 0
  %2007 = vmatprep.subr.mxu0 0.0
  %2008 = vmatpush1.msra.mxu0 %v28
  %2009 = vmatprep.subr.mxu0 0.0
  %2010 = vmatpush1.msra.mxu0 %v29
  %2011 = vmatprep.subr.mxu0 0.0
  %2012 = vmatpush1.msra.mxu0 %v30
  %2013 = vmatprep.subr.mxu0 0.0
  %2014 = vmatpush1.msra.mxu0 %v31
  %2015 = vmatprep.subr.mxu0 0.0
  %2016 = vmatpush1.msra.mxu0 0.0
  %2017 = vmatprep.subr.mxu0 0.0
  %2018 = vmatpush1.msra.mxu0 0.0
  %2019 = vmatprep.subr.mxu0 0.0
  %2020 = vmatpush1.msra.mxu0 0.0
  %2021 = vmatprep.subr.mxu0 0.0
  %2022 = vmatpush1.msra.mxu0 0.0
  %2023 = vmatprep.subr.mxu0 0.0
  %2024 = vmatpush1.msra.mxu0 0.0
  %2025 = vmatprep.subr.mxu0 0.0
  %2026 = vmatpush1.msra.mxu0 0.0
  %2027 = vmatprep.subr.mxu0 0.0
  %2028 = vmatpush1.msra.mxu0 0.0
  %2029 = vmatprep.subr.mxu0 0.0
  %2030 = vmatpush1.msra.mxu0 0.0
  %2031 = vmatprep.subr.mxu0 0.0
  %2032 = vmatpush1.msra.mxu0 0.0
  %2033 = vmatprep.subr.mxu0 0.0
  %2034 = vmatpush1.msra.mxu0 0.0
  %2035 = vmatprep.subr.mxu0 0.0
  %2036 = vmatpush1.msra.mxu0 0.0
  %2037 = vmatprep.subr.mxu0 0.0
  %2038 = vmatpush1.msra.mxu0 0.0
  %2039 = vmatprep.subr.mxu0 0.0
  %2040 = vmatpush1.msra.mxu0 0.0
  %2041 = vmatprep.subr.mxu0 0.0
  %2042 = vmatpush1.msra.mxu0 0.0
  %2043 = vmatprep.subr.mxu0 0.0
  %2044 = vmatpush1.msra.mxu0 0.0
  %2045 = vmatprep.subr.mxu0 0.0
  %2046 = vmatpush1.msra.mxu0 0.0
  %2047 = vmatprep.subr.mxu0 0.0
  %2048 = vmatpush1.msra.mxu0 0.0
  %2049 = vmatprep.subr.mxu0 0.0
  %2050 = vmatpush1.msra.mxu0 0.0
  %2051 = vmatprep.subr.mxu0 0.0
  %2052 = vmatpush1.msra.mxu0 0.0
  %2053 = vmatprep.subr.mxu0 0.0
  %2054 = vmatpush1.msra.mxu0 0.0
  %2055 = vmatprep.subr.mxu0 0.0
  %2056 = vmatpush1.msra.mxu0 0.0
  %2057 = vmatprep.subr.mxu0 0.0
  %2058 = vmatpush1.msra.mxu0 0.0
  %2059 = vmatprep.subr.mxu0 0.0
  %2060 = vmatpush1.msra.mxu0 0.0
  %2061 = vmatprep.subr.mxu0 0.0
  %2062 = vmatpush1.msra.mxu0 0.0
  %2063 = vmatprep.subr.mxu0 0.0
  %2064 = vmatpush1.msra.mxu0 0.0
  %2065 = vmatprep.subr.mxu0 0.0
  %2066 = vmatpush1.msra.mxu0 0.0
  %2067 = vmatprep.subr.mxu0 0.0
  %2068 = vmatpush1.msra.mxu0 0.0
  %2069 = vmatprep.subr.mxu0 0.0
  %2070 = vmatpush1.msra.mxu0 0.0
  %2071 = vmatprep.mubr.f32.mxu0 0.0
  %2072 = vmatmul.mubr.f32.gmra.mrb[0].mxu0 %v1999
  %v2073 = vpop.f32.mrb[0].mxu0
  %v2074 = vadd.f32 %v896, %v2073
  %v2075 = vpop.f32.mrb[0].mxu0
  %2076 = vmatprep.mubr.f32.mxu0 0.0
  %2077 = vmatmul.mubr.f32.gmra.mrb[0].mxu0 %v2002
  %v2078 = vpop.f32.mrb[0].mxu0
  %v2079 = vadd.f32 %v896, %v2078
  %v2080 = vpop.f32.mrb[0].mxu0
  %2081 = vmatprep.mubr.f32.mxu0 0.0
  %2082 = vmatmul.mubr.f32.gmra.mrb[0].mxu0 %v2005
  %v2083 = vpop.f32.mrb[0].mxu0
  %v2084 = vadd.f32 %v896, %v2083
  %v2085 = vpop.f32.mrb[0].mxu0
  %2086 = vdwg.mxu0
  %v2087 = vmax.f32 %v2074, 0.0
  %v2088 = vmax.f32 %v2079, 0.0
  %v2089 = vmax.f32 %v2084, 0.0
  %v2091 = vsel %vm993, %v2087, 0
  %v2094 = vsel %vm993, %v2088, 0
  %v2097 = vsel %vm993, %v2089, 0
  %2099 = vmatprep.subr.mxu0 0.0
  %2100 = vmatpush1.msra.mxu0 %v32
  %2101 = vmatprep.subr.mxu0 0.0
  %2102 = vmatpush1.msra.mxu0 %v33
  %2103 = vmatprep.subr.mxu0 0.0
  %2104 = vmatpush1.msra.mxu0 %v34
  %2105 = vmatprep.subr.mxu0 0.0
  %2106 = vmatpush1.msra.mxu0 %v35
  %2107 = vmatprep.subr.mxu0 0.0
  %2108 = vmatpush1.msra.mxu0 %v36
  %2109 = vmatprep.subr.mxu0 0.0
  %2110 = vmatpush1.msra.mxu0 %v37
  %2111 = vmatprep.subr.mxu0 0.0
  %2112 = vmatpush1.msra.mxu0 %v38
  %2113 = vmatprep.subr.mxu0 0.0
  %2114 = vmatpush1.msra.mxu0 %v39
  %2115 = vmatprep.subr.mxu0 0.0
  %2116 = vmatpush1.msra.mxu0 0.0
  %2117 = vmatprep.subr.mxu0 0.0
  %2118 = vmatpush1.msra.mxu0 0.0
  %2119 = vmatprep.subr.mxu0 0.0
  %2120 = vmatpush1.msra.mxu0 0.0
  %2121 = vmatprep.subr.mxu0 0.0
  %2122 = vmatpush1.msra.mxu0 0.0
  %2123 = vmatprep.subr.mxu0 0.0
  %2124 = vmatpush1.msra.mxu0 0.0
  %2125 = vmatprep.subr.mxu0 0.0
  %2126 = vmatpush1.msra.mxu0 0.0
  %2127 = vmatprep.subr.mxu0 0.0
  %2128 = vmatpush1.msra.mxu0 0.0
  %2129 = vmatprep.subr.mxu0 0.0
  %2130 = vmatpush1.msra.mxu0 0.0
  %2131 = vmatprep.subr.mxu0 0.0
  %2132 = vmatpush1.msra.mxu0 0.0
  %2133 = vmatprep.subr.mxu0 0.0
  %2134 = vmatpush1.msra.mxu0 0.0
  %2135 = vmatprep.subr.mxu0 0.0
  %2136 = vmatpush1.msra.mxu0 0.0
  %2137 = vmatprep.subr.mxu0 0.0
  %2138 = vmatpush1.msra.mxu0 0.0
  %2139 = vmatprep.subr.mxu0 0.0
  %2140 = vmatpush1.msra.mxu0 0.0
  %2141 = vmatprep.subr.mxu0 0.0
  %2142 = vmatpush1.msra.mxu0 0.0
  %2143 = vmatprep.subr.mxu0 0.0
  %2144 = vmatpush1.msra.mxu0 0.0
  %2145 = vmatprep.subr.mxu0 0.0
  %2146 = vmatpush1.msra.mxu0 0.0
  %2147 = vmatprep.subr.mxu0 0.0
  %2148 = vmatpush1.msra.mxu0 0.0
  %2149 = vmatprep.subr.mxu0 0.0
  %2150 = vmatpush1.msra.mxu0 0.0
  %2151 = vmatprep.subr.mxu0 0.0
  %2152 = vmatpush1.msra.mxu0 0.0
  %2153 = vmatprep.subr.mxu0 0.0
  %2154 = vmatpush1.msra.mxu0 0.0
  %2155 = vmatprep.subr.mxu0 0.0
  %2156 = vmatpush1.msra.mxu0 0.0
  %2157 = vmatprep.subr.mxu0 0.0
  %2158 = vmatpush1.msra.mxu0 0.0
  %2159 = vmatprep.subr.mxu0 0.0
  %2160 = vmatpush1.msra.mxu0 0.0
  %2161 = vmatprep.subr.mxu0 0.0
  %2162 = vmatpush1.msra.mxu0 0.0
  %2163 = vmatprep.mubr.f32.mxu0 0.0
  %2164 = vmatmul.mubr.f32.gmra.mrb[0].mxu0 %v2091
  %v2165 = vpop.f32.mrb[0].mxu0
  %v2166 = vadd.f32 %v992, %v2165
  %v2167 = vpop.f32.mrb[0].mxu0
  %2168 = vmatprep.mubr.f32.mxu0 0.0
  %2169 = vmatmul.mubr.f32.gmra.mrb[0].mxu0 %v2094
  %v2170 = vpop.f32.mrb[0].mxu0
  %v2171 = vpop.f32.mrb[0].mxu0
  %2172 = vmatprep.mubr.f32.mxu0 0.0
  %2173 = vmatmul.mubr.f32.gmra.mrb[0].mxu0 %v2097
  %v2174 = vpop.f32.mrb[0].mxu0
  %v2175 = vpop.f32.mrb[0].mxu0
  %2176 = vdwg.mxu0
  %v2177 = vadd.f32 %v1995, %v2166
  %v2178 = vsel %vm161, %v2177, 0.0
  %2179 = vadd.xlane.f32.xlu0 %v2178
  %v2180 = vpop.xlane.xlu0 %2179
  %v2181 = vmul.f32 %v2180, %v848
  %v2182 = vsub.f32 %v2177, %v2181
  %v2183 = vmul.f32 %v2182, %v2182
  %v2184 = vsel %vm161, %v2183, 0.0
  %2185 = vadd.xlane.f32.xlu0 %v2184
  %v2186 = vpop.xlane.xlu0 %2185
  %v2187 = vmul.f32 %v2186, %v848
  %v2188 = vadd.f32 %v2187, 1e-05
  %v2189 = vrsqrt.pop %v2188
  %v2190 = vmul.f32 %v2182, %v2189
  %v2191 = vmul.f32 %v2190, %v1098
  %v2192 = vadd.f32 %v2191, %v1103
  %v2194 = vrot.slane %v2192, 1
  %2195 = vrot.lane.b32.xlu0 %v2194, 32
  %v2196 = vpop.permute.xlu0 %2195
  %v2198 = vsel %vm161, %v2192, %v2196
  %v2200 = vsel %vm993, %v2198, 0
  %2202 = vmatprep.subr.mxu0 0.0
  %2203 = vmatpush1.msra.mxu0 %v40
  %2204 = vmatprep.subr.mxu0 0.0
  %2205 = vmatpush1.msra.mxu0 %v41
  %2206 = vmatprep.subr.mxu0 0.0
  %2207 = vmatpush1.msra.mxu0 %v42
  %2208 = vmatprep.subr.mxu0 0.0
  %2209 = vmatpush1.msra.mxu0 %v43
  %2210 = vmatprep.subr.mxu0 0.0
  %2211 = vmatpush1.msra.mxu0 %v44
  %2212 = vmatprep.subr.mxu0 0.0
  %2213 = vmatpush1.msra.mxu0 %v45
  %2214 = vmatprep.subr.mxu0 0.0
  %2215 = vmatpush1.msra.mxu0 %v46
  %2216 = vmatprep.subr.mxu0 0.0
  %2217 = vmatpush1.msra.mxu0 %v47
  %2218 = vmatprep.subr.mxu0 0.0
  %2219 = vmatpush1.msra.mxu0 0.0
  %2220 = vmatprep.subr.mxu0 0.0
  %2221 = vmatpush1.msra.mxu0 0.0
  %2222 = vmatprep.subr.mxu0 0.0
  %2223 = vmatpush1.msra.mxu0 0.0
  %2224 = vmatprep.subr.mxu0 0.0
  %2225 = vmatpush1.msra.mxu0 0.0
  %2226 = vmatprep.subr.mxu0 0.0
  %2227 = vmatpush1.msra.mxu0 0.0
  %2228 = vmatprep.subr.mxu0 0.0
  %2229 = vmatpush1.msra.mxu0 0.0
  %2230 = vmatprep.subr.mxu0 0.0
  %2231 = vmatpush1.msra.mxu0 0.0
  %2232 = vmatprep.subr.mxu0 0.0
  %2233 = vmatpush1.msra.mxu0 0.0
  %2234 = vmatprep.subr.mxu0 0.0
  %2235 = vmatpush1.msra.mxu0 0.0
  %2236 = vmatprep.subr.mxu0 0.0
  %2237 = vmatpush1.msra.mxu0 0.0
  %2238 = vmatprep.subr.mxu0 0.0
  %2239 = vmatpush1.msra.mxu0 0.0
  %2240 = vmatprep.subr.mxu0 0.0
  %2241 = vmatpush1.msra.mxu0 0.0
  %2242 = vmatprep.subr.mxu0 0.0
  %2243 = vmatpush1.msra.mxu0 0.0
  %2244 = vmatprep.subr.mxu0 0.0
  %2245 = vmatpush1.msra.mxu0 0.0
  %2246 = vmatprep.subr.mxu0 0.0
  %2247 = vmatpush1.msra.mxu0 0.0
  %2248 = vmatprep.subr.mxu0 0.0
  %2249 = vmatpush1.msra.mxu0 0.0
  %2250 = vmatprep.subr.mxu0 0.0
  %2251 = vmatpush1.msra.mxu0 0.0
  %2252 = vmatprep.subr.mxu0 0.0
  %2253 = vmatpush1.msra.mxu0 0.0
  %2254 = vmatprep.subr.mxu0 0.0
  %2255 = vmatpush1.msra.mxu0 0.0
  %2256 = vmatprep.subr.mxu0 0.0
  %2257 = vmatpush1.msra.mxu0 0.0
  %2258 = vmatprep.subr.mxu0 0.0
  %2259 = vmatpush1.msra.mxu0 0.0
  %2260 = vmatprep.subr.mxu0 0.0
  %2261 = vmatpush1.msra.mxu0 0.0
  %2262 = vmatprep.subr.mxu0 0.0
  %2263 = vmatpush1.msra.mxu0 0.0
  %2264 = vmatprep.subr.mxu0 0.0
  %2265 = vmatpush1.msra.mxu0 0.0
  %2266 = vmatprep.mubr.f32.mxu0 0.0
  %2267 = vmatmul.mubr.f32.gmra.mrb[0].mxu0 %v2200
  %v2268 = vpop.f32.mrb[0].mxu0
  %v2269 = vadd.f32 %v57, %v2268
  %v2270 = vpop.f32.mrb[0].mxu0
  %2271 = vdwg.mxu0
  %s2272 = scalar_lea.vmem %s3, 1
  %2273 = vst.msk [vmem:[%s2272] sm:$0x1] %vm1184, %v2269
  %2274 = vrot.lane.b32.xlu0 %v2198, 64
  %v2275 = vpop.permute.xlu0 %2274
  %2277 = vst.msk [vmem:[%s2272] sm:$0x1] %vm1189, %v2275
  // Predicated region
  $region14: #{_lambda_.1} parent=0 // pred_check
    _
  $region15: #{_lambda_.1} parent=0 // pred_check_branch
    %2279 = sbr.rel (0) target = $region17
  $region16: #{_lambda_.1} parent=0 // pred_region
    _
  $region17: #{_lambda_.1} parent=0 // pred_fallthru
    _
  // Predicated region
  $region18: #{_lambda_.1} parent=0 // pred_check
    _
  $region19: #{_lambda_.1} parent=0 // pred_check_branch
    %2281 = sbr.rel (0) target = $region21
  $region20: #{_lambda_.1} parent=0 // pred_region
    _
  $region21: #{_lambda_.1} parent=0 // pred_fallthru
    _

</llo_original>
